<compile_context>
chip_gen: v6e
topology: v6e:2x2x1
jax: 0.10.0
libtpu: 0.0.40
codegen_flags: <defaults>
</compile_context>

<pallas_src>
import jax
import jax.numpy as jnp
from jax.experimental import pallas as pl
from jax.experimental.pallas import tpu as pltpu


# ---------------------------------------------------------------------------
# Kernel body
# ---------------------------------------------------------------------------
def branch_fusion_kernel(x_ref, w1t_ref, w2t_ref, o_ref):
    x = x_ref[...]                                          # [BM, C], native dtype
    # fc1: [BM, C] @ [C, Hp] -> [BM, Hp]   (pre-transposed weight: no vxpose)
    y1 = jnp.dot(x, w1t_ref[...],
                 preferred_element_type=jnp.float32,
                 precision=jax.lax.Precision.HIGHEST)       # MXU is free (mem-bound)
    y2 = jnp.maximum(y1, 0.0)                               # relu
    # fc2: [BM, Hp] @ [Hp, C] -> [BM, C]
    y3 = jnp.dot(y2, w2t_ref[...],
                 preferred_element_type=jnp.float32,
                 precision=jax.lax.Precision.HIGHEST)
    # sigmoid(y) == 0.5*(tanh(0.5*y)+1): single EUP op, no full-precision divide.
    y4 = 0.5 * (jnp.tanh(0.5 * y3) + 1.0)
    # Gate in f32; downcast only at the (lane-dense) store.
    o_ref[...] = (x.astype(jnp.float32) * y4).astype(o_ref.dtype)


# ---------------------------------------------------------------------------
# Weight preparation (hoist out of the per-call path / cache in real use)
# ---------------------------------------------------------------------------
def prepare_branch_fusion_weights(w1, w2):
    """w1: fc1.weight [H, C]; w2: fc2.weight [C, H].

    Returns MXU-native, hidden-padded weights:
      w1t: [C, Hp]   (fc1, transposed)
      w2t: [Hp, C]   (fc2, transposed)
    Zero padding of the hidden dim is numerically a no-op (padded y1/y2
    columns are zero and padded w2t rows contribute nothing to y3)."""
    H, C = w1.shape
    assert w2.shape == (C, H), (w1.shape, w2.shape)
    Hp = ((max(H, 1) + 127) // 128) * 128
    w1t = jnp.zeros((C, Hp), w1.dtype).at[:, :H].set(w1.T)
    w2t = jnp.zeros((Hp, C), w2.dtype).at[:H, :].set(w2.T)
    return w1t, w2t


# ---------------------------------------------------------------------------
# Tile sizing / VMEM budgeting
# ---------------------------------------------------------------------------
def _vmem_bytes(bm, C, Hp, x_itemsize, w_itemsize):
    xo = 2 * (2 * bm * C * x_itemsize)        # x + out tiles, double-buffered
    w = 2 * (C * Hp * w_itemsize)             # both weights, single buffer
    inter = 4 * bm * max(C, Hp) * 4           # f32 y1/y2/y3/gate intermediates (rough)
    return xo + w + inter


def _pick_bm(B, C, Hp, x_itemsize, w_itemsize, block_b, vmem_budget):
    if B <= 8:
        return B                              # one full-batch tile (legal block shape)
    if block_b is None:
        block_b = 4096                        # mem-bound: big tiles -> HBM roofline
    bm = max(8, (min(block_b, B) // 8) * 8)   # multiple of 8; never one giant block
    # Keep >= 2 batch tiles so the "parallel" axis shards across v7x's 2 TCs.
    if bm > B // 2:
        bm = max(8, ((B // 2) // 8) * 8)
    # Shrink until the footprint fits the budget (v7x: 64 MiB physical VMEM).
    while bm > 8 and _vmem_bytes(bm, C, Hp, x_itemsize, w_itemsize) > vmem_budget:
        bm = max(8, ((bm // 2) // 8) * 8)
    return bm


# ---------------------------------------------------------------------------
# pallas_call wrappers
# ---------------------------------------------------------------------------
def branch_fusion_prepared(x, w1t, w2t, *, block_b=None):
    """x: [B, C]; w1t: [C, Hp]; w2t: [Hp, C] (from prepare_branch_fusion_weights)."""
    B, C = x.shape
    Cw, Hp = w1t.shape
    assert Cw == C and w2t.shape == (Hp, C)

    bm = _pick_bm(B, C, Hp, x.dtype.itemsize, w1t.dtype.itemsize,
                  block_b, vmem_budget=48 * 1024 * 1024)
    n_tiles = pl.cdiv(B, bm)                  # ragged last tile -> Pallas masked DMA
    est = _vmem_bytes(bm, C, Hp, x.dtype.itemsize, w1t.dtype.itemsize)
    # Raise the scoped VMEM limit to cover the chosen tiles; stay below v7x's
    # 64 MiB physical VMEM with headroom.
    vmem_limit = int(min(56 * 1024 * 1024,
                         max(32 * 1024 * 1024, est + 8 * 1024 * 1024)))

    def call(single_buffer_weights):
        wkw = {"pipeline_mode": pl.Buffered(1)} if single_buffer_weights else {}
        return pl.pallas_call(
            branch_fusion_kernel,
            out_shape=jax.ShapeDtypeStruct((B, C), x.dtype),
            grid_spec=pltpu.PrefetchScalarGridSpec(
                num_scalar_prefetch=0,
                grid=(n_tiles,),
                in_specs=[
                    # x tile: pipelined over the batch axis.
                    pl.BlockSpec((bm, C), lambda i: (i, 0)),
                    # Weights: constant block index -> resident in VMEM.
                    pl.BlockSpec((C, Hp), lambda i: (0, 0), **wkw),
                    pl.BlockSpec((Hp, C), lambda i: (0, 0), **wkw),
                ],
                out_specs=pl.BlockSpec((bm, C), lambda i: (i, 0)),
            ),
            compiler_params=pltpu.CompilerParams(
                dimension_semantics=("parallel",),
                vmem_limit_bytes=vmem_limit,
            ),
        )(x, w1t, w2t)

    try:
        # Single-buffer the resident weights (halves their VMEM, esp. on v7x).
        return call(True)
    except Exception:
        # Fallback if this JAX build rejects pl.Buffered(1) on an input spec.
        return call(False)


def branch_fusion(x, w1, w2, *, block_b=None):
    """Convenience wrapper: x [B, C], w1 = fc1.weight [C//r, C], w2 = fc2.weight [C, C//r]."""
    w1t, w2t = prepare_branch_fusion_weights(w1, w2)
    return branch_fusion_prepared(x, w1t, w2t, block_b=block_b)


# ---------------------------------------------------------------------------
# Pure-JAX reference
# ---------------------------------------------------------------------------
def branch_fusion_ref(x, w1, w2):
    y1 = jnp.dot(x, w1.T, precision=jax.lax.Precision.HIGHEST)
    y2 = jnp.maximum(y1, 0.0)
    y3 = jnp.dot(y2, w2.T, precision=jax.lax.Precision.HIGHEST)
    return x * jax.nn.sigmoid(y3)


if __name__ == "__main__":
    # Small deterministic shapes consistent with the module:
    # batch=16, channel=64, reduction=16 -> hidden=4.
    B, C, R = 16, 64, 16
    H = C // R

    key = jax.random.PRNGKey(0)
    kx, k1, k2 = jax.random.split(key, 3)
    x = jax.random.normal(kx, (B, C), dtype=jnp.float32)
    w1 = jax.random.normal(k1, (H, C), dtype=jnp.float32) * (1.0 / jnp.sqrt(C))
    w2 = jax.random.normal(k2, (C, H), dtype=jnp.float32) * (1.0 / jnp.sqrt(H))

    # Weight prep (pad + transpose) hoisted out of the per-call path.
    w1t, w2t = prepare_branch_fusion_weights(w1, w2)
    out = branch_fusion_prepared(x, w1t, w2t)
    out = jax.block_until_ready(out)

    ref = branch_fusion_ref(x, w1, w2)
    assert out.shape == (B, C)
    assert jnp.allclose(out, ref, atol=1e-4, rtol=1e-4), \
        float(jnp.max(jnp.abs(out - ref)))

    # TODO(synk): the module's self.*_feature attribute caching (Python side
    # effects) and the constructed-but-unused nn.AdaptiveAvgPool2d have no
    # Pallas equivalent and are not represented here.
    print("KERNEL_OK")
</pallas_src>

<mosaic_0001>
module attributes {stable_mosaic.version = 11 : i64} {
  func.func @branch_fusion_kernel(%arg0: i32, %arg1: memref<8x64xf32, #tpu.memory_space<vmem>>, %arg2: memref<64x128xf32, #tpu.memory_space<vmem>>, %arg3: memref<128x64xf32, #tpu.memory_space<vmem>>, %arg4: memref<8x64xf32, #tpu.memory_space<vmem>>) attributes {dimension_semantics = [#tpu.dimension_semantics<parallel>], iteration_bounds = array<i64: 2>, scalar_prefetch = 0 : i64, scratch_operands = 0 : i64, tpu.core_type = #tpu.core_type<tc>, window_params = [{transform_indices = @transform_0, window_bounds = array<i64: 8, 64>}, {pipeline_mode = #tpu.pipeline_mode<synchronous>, transform_indices = @transform_1, window_bounds = array<i64: 64, 128>}, {pipeline_mode = #tpu.pipeline_mode<synchronous>, transform_indices = @transform_2, window_bounds = array<i64: 128, 64>}, {transform_indices = @transform_3, window_bounds = array<i64: 8, 64>}]} {
    %c0 = arith.constant 0 : index
    %c0_0 = arith.constant 0 : index
    %0 = vector.load %arg1[%c0, %c0_0] : memref<8x64xf32, #tpu.memory_space<vmem>>, vector<8x64xf32>
    %c0_1 = arith.constant 0 : index
    %c0_2 = arith.constant 0 : index
    %1 = vector.load %arg2[%c0_1, %c0_2] : memref<64x128xf32, #tpu.memory_space<vmem>>, vector<64x128xf32>
    %cst = arith.constant dense<0.000000e+00> : vector<8x128xf32>
    %2 = tpu.matmul %0, %1, %cst {dimension_numbers = #tpu.dot_dimension_numbers<[1], [0], [0], [1], [0, 0, 1, 1], [], []>, precision = #tpu.contract_precision<fp32>} : vector<8x64xf32>, vector<64x128xf32>, vector<8x128xf32> -> vector<8x128xf32>
    %cst_3 = arith.constant 0.000000e+00 : f32
    %3 = vector.broadcast %cst_3 : f32 to vector<8x128xf32>
    %4 = arith.maximumf %2, %3 : vector<8x128xf32>
    %c0_4 = arith.constant 0 : index
    %c0_5 = arith.constant 0 : index
    %5 = vector.load %arg3[%c0_4, %c0_5] : memref<128x64xf32, #tpu.memory_space<vmem>>, vector<128x64xf32>
    %cst_6 = arith.constant dense<0.000000e+00> : vector<8x64xf32>
    %6 = tpu.matmul %4, %5, %cst_6 {dimension_numbers = #tpu.dot_dimension_numbers<[1], [0], [0], [1], [0, 0, 1, 1], [], []>, precision = #tpu.contract_precision<fp32>} : vector<8x128xf32>, vector<128x64xf32>, vector<8x64xf32> -> vector<8x64xf32>
    %cst_7 = arith.constant 5.000000e-01 : f32
    %7 = vector.broadcast %cst_7 : f32 to vector<8x64xf32>
    %8 = arith.mulf %7, %6 : vector<8x64xf32>
    %9 = math.tanh %8 : vector<8x64xf32>
    %cst_8 = arith.constant 1.000000e+00 : f32
    %10 = vector.broadcast %cst_8 : f32 to vector<8x64xf32>
    %11 = arith.addf %9, %10 : vector<8x64xf32>
    %cst_9 = arith.constant 5.000000e-01 : f32
    %12 = vector.broadcast %cst_9 : f32 to vector<8x64xf32>
    %13 = arith.mulf %12, %11 : vector<8x64xf32>
    %14 = arith.mulf %0, %13 : vector<8x64xf32>
    %c0_10 = arith.constant 0 : index
    %c0_11 = arith.constant 0 : index
    %15 = vector.load %arg4[%c0_10, %c0_11] : memref<8x64xf32, #tpu.memory_space<vmem>>, vector<8x64xf32>
    tpu.vector_store %arg4[%c0_10, %c0_11], %14 {strides = array<i32>} : memref<8x64xf32, #tpu.memory_space<vmem>>, vector<8x64xf32>,
    return
  }
  func.func @transform_0(%arg0: i32) -> (i32, i32) {
    %c0_i32 = arith.constant 0 : i32
    %c0_i32_0 = arith.constant 0 : i32
    return %arg0, %c0_i32 : i32, i32
  }
  func.func @transform_1(%arg0: i32) -> (i32, i32) {
    %c0_i32 = arith.constant 0 : i32
    %c0_i32_0 = arith.constant 0 : i32
    %c0_i32_1 = arith.constant 0 : i32
    return %c0_i32, %c0_i32_0 : i32, i32
  }
  func.func @transform_2(%arg0: i32) -> (i32, i32) {
    %c0_i32 = arith.constant 0 : i32
    %c0_i32_0 = arith.constant 0 : i32
    %c0_i32_1 = arith.constant 0 : i32
    return %c0_i32, %c0_i32_0 : i32, i32
  }
  func.func @transform_3(%arg0: i32) -> (i32, i32) {
    %c0_i32 = arith.constant 0 : i32
    %c0_i32_0 = arith.constant 0 : i32
    return %arg0, %c0_i32 : i32, i32
  }
}

module attributes {stable_mosaic.version = 11 : i64} {
  func.func @branch_fusion_kernel(%arg0: i32, %arg1: memref<8x64xf32, #tpu.memory_space<vmem>>, %arg2: memref<64x128xf32, #tpu.memory_space<vmem>>, %arg3: memref<128x64xf32, #tpu.memory_space<vmem>>, %arg4: memref<8x64xf32, #tpu.memory_space<vmem>>) attributes {dimension_semantics = [#tpu.dimension_semantics<parallel>], iteration_bounds = array<i64: 2>, scalar_prefetch = 0 : i64, scratch_operands = 0 : i64, tpu.core_type = #tpu.core_type<tc>, window_params = [{transform_indices = @transform_0, window_bounds = array<i64: 8, 64>}, {pipeline_mode = #tpu.pipeline_mode<synchronous>, transform_indices = @transform_1, window_bounds = array<i64: 64, 128>}, {pipeline_mode = #tpu.pipeline_mode<synchronous>, transform_indices = @transform_2, window_bounds = array<i64: 128, 64>}, {transform_indices = @transform_3, window_bounds = array<i64: 8, 64>}]} {
    %c0 = arith.constant 0 : index
    %c0_0 = arith.constant 0 : index
    %0 = vector.load %arg1[%c0, %c0_0] : memref<8x64xf32, #tpu.memory_space<vmem>>, vector<8x64xf32>
    %c0_1 = arith.constant 0 : index
    %c0_2 = arith.constant 0 : index
    %1 = vector.load %arg2[%c0_1, %c0_2] : memref<64x128xf32, #tpu.memory_space<vmem>>, vector<64x128xf32>
    %cst = arith.constant dense<0.000000e+00> : vector<8x128xf32>
    %2 = tpu.matmul %0, %1, %cst {dimension_numbers = #tpu.dot_dimension_numbers<[1], [0], [0], [1], [0, 0, 1, 1], [], []>, precision = #tpu.contract_precision<fp32>} : vector<8x64xf32>, vector<64x128xf32>, vector<8x128xf32> -> vector<8x128xf32>
    %cst_3 = arith.constant 0.000000e+00 : f32
    %3 = vector.broadcast %cst_3 : f32 to vector<8x128xf32>
    %4 = arith.maximumf %2, %3 : vector<8x128xf32>
    %c0_4 = arith.constant 0 : index
    %c0_5 = arith.constant 0 : index
    %5 = vector.load %arg3[%c0_4, %c0_5] : memref<128x64xf32, #tpu.memory_space<vmem>>, vector<128x64xf32>
    %cst_6 = arith.constant dense<0.000000e+00> : vector<8x64xf32>
    %6 = tpu.matmul %4, %5, %cst_6 {dimension_numbers = #tpu.dot_dimension_numbers<[1], [0], [0], [1], [0, 0, 1, 1], [], []>, precision = #tpu.contract_precision<fp32>} : vector<8x128xf32>, vector<128x64xf32>, vector<8x64xf32> -> vector<8x64xf32>
    %cst_7 = arith.constant 5.000000e-01 : f32
    %7 = vector.broadcast %cst_7 : f32 to vector<8x64xf32>
    %8 = arith.mulf %7, %6 : vector<8x64xf32>
    %9 = math.tanh %8 : vector<8x64xf32>
    %cst_8 = arith.constant 1.000000e+00 : f32
    %10 = vector.broadcast %cst_8 : f32 to vector<8x64xf32>
    %11 = arith.addf %9, %10 : vector<8x64xf32>
    %cst_9 = arith.constant 5.000000e-01 : f32
    %12 = vector.broadcast %cst_9 : f32 to vector<8x64xf32>
    %13 = arith.mulf %12, %11 : vector<8x64xf32>
    %14 = arith.mulf %0, %13 : vector<8x64xf32>
    %c0_10 = arith.constant 0 : index
    %c0_11 = arith.constant 0 : index
    %15 = vector.load %arg4[%c0_10, %c0_11] : memref<8x64xf32, #tpu.memory_space<vmem>>, vector<8x64xf32>
    tpu.vector_store %arg4[%c0_10, %c0_11], %14 {strides = array<i32>} : memref<8x64xf32, #tpu.memory_space<vmem>>, vector<8x64xf32>,
    return
  }
  func.func @transform_0(%arg0: i32) -> (i32, i32) {
    %c0_i32 = arith.constant 0 : i32
    %c0_i32_0 = arith.constant 0 : i32
    return %arg0, %c0_i32 : i32, i32
  }
  func.func @transform_1(%arg0: i32) -> (i32, i32) {
    %c0_i32 = arith.constant 0 : i32
    %c0_i32_0 = arith.constant 0 : i32
    %c0_i32_1 = arith.constant 0 : i32
    return %c0_i32, %c0_i32_0 : i32, i32
  }
  func.func @transform_2(%arg0: i32) -> (i32, i32) {
    %c0_i32 = arith.constant 0 : i32
    %c0_i32_0 = arith.constant 0 : i32
    %c0_i32_1 = arith.constant 0 : i32
    return %c0_i32, %c0_i32_0 : i32, i32
  }
  func.func @transform_3(%arg0: i32) -> (i32, i32) {
    %c0_i32 = arith.constant 0 : i32
    %c0_i32_0 = arith.constant 0 : i32
    return %arg0, %c0_i32 : i32, i32
  }
}

</mosaic_0001>

<llo_original>
// kernel: tpu_custom_call.1
$region0: #{tpu_custom_call.1}
  #allocation0 [shape = 'u32[]', space=smem, size = 0x4, offset = 0x4, fixed_abs, tag = 'smem constant byte address 0x4 - core index']
  #allocation1 [shape = 'u32[144,128]{1,0:T(1,128)}', space=vmem, size = 0x12000, scoped, tag = 'internal scratch']
  %s0 = inlined_call_operand.vmem [shape: f32[16,64], index: 0, kind: input, shape index: {}]
  %s1 = inlined_call_operand.vmem [shape: f32[64,128], index: 1, kind: input, shape index: {}]
  %s2 = inlined_call_operand.vmem [shape: f32[128,64], index: 2, kind: input, shape index: {}]
  %s3 = inlined_call_operand.hbm [shape: f32[16,64], index: 3, kind: output, shape index: {}]
  %s4 = sld [smem:[#allocation0]]
  $region45: #{tpu_custom_call.1} parent=0
    _
  %s6 = ssub.s32 1, %s4
  %s7 = scalar_select 0, %s6, %s4
  $region1: #{tpu_custom_call.1} parent=0
    #allocation2 [shape = 'u8[8192]{0}', space=vmem, size = 0x2000, scoped, tag = 'output window, operand 0']
    #allocation3 [shape = 's32[2]{0}', space=sflag, size = 0x8, scoped, tag = 'scoped memory for tpu_custom_call.1']
    %8 = vsyncpa [#allocation3], 0
    %s9 = scalar_lea.sflag [#allocation3], 1
    %10 = vsyncpa %s9, 0
    loop: start=0, step=1, limit=4
    $region2: #{tpu_custom_call.1} parent=1 // loop_pre_header
      _
    $region3: #{tpu_custom_call.1} parent=1 // loop_header
      %s12 = sphi 0, %s16
      %p13 = scmp.ge.s32.totalorder %s12, 4
      %s22 = sphi 0, %s24
      %s25 = sphi 0, %s22
      %s26 = sphi 0, %s25
      %s42 = sphi 0, %s26
      %s46 = sphi 0, %s46
      %s48 = sphi 0, %s46
      %s49 = sphi 0, %s48
      %s63 = sphi 0, %s49
      %s67 = sphi 0, %s67
      %s69 = sphi 0, %s67
      %s70 = sphi 0, %s69
      %s84 = sphi 0, %s70
      %s90 = sphi 0, %s92
      %s93 = sphi 0, %s90
      %s94 = sphi 0, %s93
      %s110 = sphi 0, %s94
    $region4: #{tpu_custom_call.1} parent=1 // loop_header_branch
      %15 = sbr.rel (%p13) target = $region8
    $region5: #{tpu_custom_call.1} parent=1 // loop_body
      %s17 = ssub.s32 %s12, 1
      %s18 = ssub.s32 %s12, 2
      %s19 = sadd.s32 %s12, 1
      %s20 = ssub.s32 %s12, %s19
      %p21 = scmp.eq.s32.totalorder %s20, 0
      %s23 = sadd.s32 %s22, 1
      %s24 = scalar_select %p21, %s22, %s23
      %p27 = pneg %p21
      %p28 = scmp.eq.s32.totalorder %s12, 1
      %p29 = por %p27, %p28
      %p30 = scmp.ne.s32.totalorder %s22, %s25
      %p31 = scmp.eq.s32.totalorder %s12, 0
      %p32 = por %p30, %p31
      %p33 = scmp.ne.s32.totalorder %s22, %s25
      %p34 = scmp.eq.s32.totalorder %s17, 1
      %p35 = por %p33, %p34
      %p36 = scmp.ne.s32.totalorder %s25, %s26
      %p37 = scmp.eq.s32.totalorder %s17, 0
      %p38 = por %p36, %p37
      %p39 = scmp.ne.s32.totalorder %s25, %s26
      %p40 = scmp.eq.s32.totalorder %s18, 1
      %p41 = por %p39, %p40
      %p43 = scmp.ne.s32.totalorder %s26, %s42
      %p44 = scmp.eq.s32.totalorder %s18, 0
      %p45 = por %p43, %p44
      %s47 = sadd.s32 %s46, 1
      %p50 = scmp.eq.s32.totalorder %s12, 1
      %p51 = scmp.ne.s32.totalorder %s46, %s48
      %p52 = scmp.eq.s32.totalorder %s12, 0
      %p53 = por %p51, %p52
      %p54 = scmp.ne.s32.totalorder %s46, %s48
      %p55 = scmp.eq.s32.totalorder %s17, 1
      %p56 = por %p54, %p55
      %p57 = scmp.ne.s32.totalorder %s48, %s49
      %p58 = scmp.eq.s32.totalorder %s17, 0
      %p59 = por %p57, %p58
      %p60 = scmp.ne.s32.totalorder %s48, %s49
      %p61 = scmp.eq.s32.totalorder %s18, 1
      %p62 = por %p60, %p61
      %p64 = scmp.ne.s32.totalorder %s49, %s63
      %p65 = scmp.eq.s32.totalorder %s18, 0
      %p66 = por %p64, %p65
      %s68 = sadd.s32 %s67, 1
      %p71 = scmp.eq.s32.totalorder %s12, 1
      %p72 = scmp.ne.s32.totalorder %s67, %s69
      %p73 = scmp.eq.s32.totalorder %s12, 0
      %p74 = por %p72, %p73
      %p75 = scmp.ne.s32.totalorder %s67, %s69
      %p76 = scmp.eq.s32.totalorder %s17, 1
      %p77 = por %p75, %p76
      %p78 = scmp.ne.s32.totalorder %s69, %s70
      %p79 = scmp.eq.s32.totalorder %s17, 0
      %p80 = por %p78, %p79
      %p81 = scmp.ne.s32.totalorder %s69, %s70
      %p82 = scmp.eq.s32.totalorder %s18, 1
      %p83 = por %p81, %p82
      %p85 = scmp.ne.s32.totalorder %s70, %s84
      %p86 = scmp.eq.s32.totalorder %s18, 0
      %p87 = por %p85, %p86
      %s88 = ssub.s32 %s12, %s19
      %p89 = scmp.eq.s32.totalorder %s88, 0
      %s91 = sadd.s32 %s90, 1
      %s92 = scalar_select %p89, %s90, %s91
      %p95 = pneg %p89
      %p96 = scmp.eq.s32.totalorder %s12, 1
      %p97 = por %p95, %p96
      %p98 = scmp.ne.s32.totalorder %s90, %s93
      %p99 = scmp.eq.s32.totalorder %s12, 0
      %p100 = por %p98, %p99
      %p101 = scmp.ne.s32.totalorder %s90, %s93
      %p102 = scmp.eq.s32.totalorder %s17, 1
      %p103 = por %p101, %p102
      %p104 = scmp.ne.s32.totalorder %s93, %s94
      %p105 = scmp.eq.s32.totalorder %s17, 0
      %p106 = por %p104, %p105
      %p107 = scmp.ne.s32.totalorder %s93, %s94
      %p108 = scmp.eq.s32.totalorder %s18, 1
      %p109 = por %p107, %p108
      %p111 = scmp.ne.s32.totalorder %s94, %s110
      %p112 = scmp.eq.s32.totalorder %s18, 0
      %p113 = por %p111, %p112
      %p114 = scmp.le.s32.totalorder 1, %s12
      %p115 = scmp.lt.s32.totalorder %s12, 3
      %p116 = pnand %p114, %p115
      %p117 = pneg %p116
      // Predicated region
      $region9: #{tpu_custom_call.1} parent=5 // pred_check
        _
      $region10: #{tpu_custom_call.1} parent=5 // pred_check_branch
        %119 = sbr.rel (%p116) target = $region12
      $region11: #{tpu_custom_call.1} parent=5 // pred_region
        %s120 = ssub.s32 %s12, 1
        // Predicated region
        $region13: #{tpu_custom_call.1} parent=11 // pred_check
          %p121 = pneg %p59
        $region14: #{tpu_custom_call.1} parent=11 // pred_check_branch
          %123 = sbr.rel (%p121) target = $region16
        $region15: #{tpu_custom_call.1} parent=11 // pred_region
          _
        $region16: #{tpu_custom_call.1} parent=11 // pred_fallthru
          _
        // Predicated region
        $region17: #{tpu_custom_call.1} parent=11 // pred_check
          %p124 = pneg %p80
        $region18: #{tpu_custom_call.1} parent=11 // pred_check_branch
          %126 = sbr.rel (%p124) target = $region20
        $region19: #{tpu_custom_call.1} parent=11 // pred_region
          _
        $region20: #{tpu_custom_call.1} parent=11 // pred_fallthru
          _
      $region12: #{tpu_custom_call.1} parent=5 // pred_fallthru
        _
      %p127 = scmp.lt.s32.totalorder %s12, 2
      // Predicated region
      $region21: #{tpu_custom_call.1} parent=5 // pred_check
        %p128 = pneg %p127
      $region22: #{tpu_custom_call.1} parent=5 // pred_check_branch
        %130 = sbr.rel (%p128) target = $region24
      $region23: #{tpu_custom_call.1} parent=5 // pred_region
        // Predicated region
        $region25: #{tpu_custom_call.1} parent=23 // pred_check
          %p131 = pneg %p32
        $region26: #{tpu_custom_call.1} parent=23 // pred_check_branch
          %133 = sbr.rel (%p131) target = $region28
        $region27: #{tpu_custom_call.1} parent=23 // pred_region
          %p134 = scmp.lt.s32.totalorder %s12, 1
          %s135 = scalar_select %p134, %s12, 1
          %s136 = smul.addr %s135, 8
          %s137 = scalar_lea.vmem %s0, %s136
        $region28: #{tpu_custom_call.1} parent=23 // pred_fallthru
          _
      $region24: #{tpu_custom_call.1} parent=5 // pred_fallthru
        _
      %p138 = scmp.le.s32.totalorder 1, %s12
      %p139 = scmp.lt.s32.totalorder %s12, 3
      %p140 = pnand %p138, %p139
      %p141 = pneg %p140
      // Predicated region
      $region29: #{tpu_custom_call.1} parent=5 // pred_check
        _
      $region30: #{tpu_custom_call.1} parent=5 // pred_check_branch
        %143 = sbr.rel (%p140) target = $region32
      $region31: #{tpu_custom_call.1} parent=5 // pred_region
        %s144 = ssub.s32 %s12, 1
        %p145 = scmp.lt.s32.totalorder %s17, 1
        %s146 = scalar_select %p145, %s17, 1
        %s147 = smul.addr %s146, 8
        %s148 = scalar_lea.vmem %s0, %s147
        %p149 = pneg %p38
        %p150 = pneg %p35
        %p151 = pneg %p59
        %p152 = pneg %p56
        %p153 = pneg %p80
        %p154 = pneg %p77
        %p155 = pneg %p106
        %p156 = pneg %p103
        %s157 = sand.u32 %s93, 1
        %s158 = scalar_lea.sflag [#allocation3], %s157
        %s159 = sand.u32 %s93, 1
        %s160 = smul.addr %s159, 8
        %s161 = scalar_lea.vmem [#allocation2], %s160
        %p162 = scmp.lt.s32.totalorder %s17, 1
        %s163 = scalar_select %p162, %s17, 1
        %s164 = smul.addr %s163, 8
        %s165 = scalar_lea.vmem %s0, %s164
        %v166 = vld [vmem:[%s165] sm:$0xff]
        %v167 = vld [vmem:[%s1] sm:$0xff]
        %v168 = vld [vmem:[%s1 + $0x8] sm:$0xff]
        %v169 = vld [vmem:[%s1 + $0x10] sm:$0xff]
        %v170 = vld [vmem:[%s1 + $0x18] sm:$0xff]
        %v171 = vld [vmem:[%s1 + $0x20] sm:$0xff]
        %v172 = vld [vmem:[%s1 + $0x28] sm:$0xff]
        %v173 = vld [vmem:[%s1 + $0x30] sm:$0xff]
        %v174 = vld [vmem:[%s1 + $0x38] sm:$0xff]
        %vm175 = vcmask 523264
        %v177 = vsel %vm175, %v166, 0
        %179 = vmatprep.subr.mxu0 0.0
        %180 = vmatpush1.msra.mxu0 0.0
        %181 = vmatprep.subr.mxu0 0.0
        %182 = vmatpush1.msra.mxu0 0.0
        %183 = vmatprep.subr.mxu0 0.0
        %184 = vmatpush1.msra.mxu0 0.0
        %185 = vmatprep.subr.mxu0 0.0
        %186 = vmatpush1.msra.mxu0 0.0
        %187 = vmatprep.subr.mxu0 0.0
        %188 = vmatpush1.msra.mxu0 0.0
        %189 = vmatprep.subr.mxu0 0.0
        %190 = vmatpush1.msra.mxu0 0.0
        %191 = vmatprep.subr.mxu0 0.0
        %192 = vmatpush1.msra.mxu0 0.0
        %193 = vmatprep.subr.mxu0 0.0
        %194 = vmatpush1.msra.mxu0 0.0
        %195 = vmatprep.subr.mxu0 0.0
        %v196 = vand.u32 %v174, 4294901760
        %197 = vmatpush1.msra.mxu0 %v196
        %198 = vmatprep.subr.mxu0 0.0
        %v199 = vand.u32 %v173, 4294901760
        %200 = vmatpush1.msra.mxu0 %v199
        %201 = vmatprep.subr.mxu0 0.0
        %v202 = vand.u32 %v172, 4294901760
        %203 = vmatpush1.msra.mxu0 %v202
        %204 = vmatprep.subr.mxu0 0.0
        %v205 = vand.u32 %v171, 4294901760
        %206 = vmatpush1.msra.mxu0 %v205
        %207 = vmatprep.subr.mxu0 0.0
        %v208 = vand.u32 %v170, 4294901760
        %209 = vmatpush1.msra.mxu0 %v208
        %210 = vmatprep.subr.mxu0 0.0
        %v211 = vand.u32 %v169, 4294901760
        %212 = vmatpush1.msra.mxu0 %v211
        %213 = vmatprep.subr.mxu0 0.0
        %v214 = vand.u32 %v168, 4294901760
        %215 = vmatpush1.msra.mxu0 %v214
        %216 = vmatprep.subr.mxu0 0.0
        %v217 = vand.u32 %v167, 4294901760
        %218 = vmatpush1.msra.mxu0 %v217
        %219 = vmatprep.subr.mxu0 0.0
        %220 = vmatpush2.msra.mxu0 0.0
        %221 = vmatprep.subr.mxu0 0.0
        %222 = vmatpush2.msra.mxu0 0.0
        %223 = vmatprep.subr.mxu0 0.0
        %224 = vmatpush2.msra.mxu0 0.0
        %225 = vmatprep.subr.mxu0 0.0
        %226 = vmatpush2.msra.mxu0 0.0
        %227 = vmatprep.subr.mxu0 0.0
        %228 = vmatpush2.msra.mxu0 0.0
        %229 = vmatprep.subr.mxu0 0.0
        %230 = vmatpush2.msra.mxu0 0.0
        %231 = vmatprep.subr.mxu0 0.0
        %232 = vmatpush2.msra.mxu0 0.0
        %233 = vmatprep.subr.mxu0 0.0
        %234 = vmatpush2.msra.mxu0 0.0
        %235 = vmatprep.subr.mxu0 0.0
        %236 = vmatpush2.msra.mxu0 0.0
        %237 = vmatprep.subr.mxu0 0.0
        %238 = vmatpush2.msra.mxu0 0.0
        %239 = vmatprep.subr.mxu0 0.0
        %240 = vmatpush2.msra.mxu0 0.0
        %241 = vmatprep.subr.mxu0 0.0
        %242 = vmatpush2.msra.mxu0 0.0
        %243 = vmatprep.subr.mxu0 0.0
        %244 = vmatpush2.msra.mxu0 0.0
        %245 = vmatprep.subr.mxu0 0.0
        %246 = vmatpush2.msra.mxu0 0.0
        %247 = vmatprep.subr.mxu0 0.0
        %248 = vmatpush2.msra.mxu0 0.0
        %249 = vmatprep.subr.mxu0 0.0
        %250 = vmatpush2.msra.mxu0 0.0
        %251 = vmatprep.mubr.f32.mxu0 0.0
        %v252 = vand.u32 %v177, 4294901760
        %v253 = vsub.f32 %v177, %v252
        %v254 = vand.u32 %v253, 4294901760
        %v255 = vsub.f32 %v253, %v254
        %v256 = vand.u32 %v255, 4294901760
        %257 = vmatmul.mubr.f32.gmra.mxu0 %v256
        %v258 = vpop.f32.mrf.mxu0
        %v259 = vadd.f32 0.0, %v258
        %v260 = vpop.f32.mrf.mxu0
        %261 = vdwg.mxu0
        %262 = vmatprep.subr.mxu0 0.0
        %263 = vmatpush1.msra.mxu0 0.0
        %264 = vmatprep.subr.mxu0 0.0
        %265 = vmatpush1.msra.mxu0 0.0
        %266 = vmatprep.subr.mxu0 0.0
        %267 = vmatpush1.msra.mxu0 0.0
        %268 = vmatprep.subr.mxu0 0.0
        %269 = vmatpush1.msra.mxu0 0.0
        %270 = vmatprep.subr.mxu0 0.0
        %271 = vmatpush1.msra.mxu0 0.0
        %272 = vmatprep.subr.mxu0 0.0
        %273 = vmatpush1.msra.mxu0 0.0
        %274 = vmatprep.subr.mxu0 0.0
        %275 = vmatpush1.msra.mxu0 0.0
        %276 = vmatprep.subr.mxu0 0.0
        %277 = vmatpush1.msra.mxu0 0.0
        %278 = vmatprep.subr.mxu0 0.0
        %v279 = vand.u32 %v174, 4294901760
        %v280 = vsub.f32 %v174, %v279
        %v281 = vand.u32 %v280, 4294901760
        %v282 = vsub.f32 %v280, %v281
        %v283 = vand.u32 %v282, 4294901760
        %284 = vmatpush1.msra.mxu0 %v283
        %285 = vmatprep.subr.mxu0 0.0
        %v286 = vand.u32 %v173, 4294901760
        %v287 = vsub.f32 %v173, %v286
        %v288 = vand.u32 %v287, 4294901760
        %v289 = vsub.f32 %v287, %v288
        %v290 = vand.u32 %v289, 4294901760
        %291 = vmatpush1.msra.mxu0 %v290
        %292 = vmatprep.subr.mxu0 0.0
        %v293 = vand.u32 %v172, 4294901760
        %v294 = vsub.f32 %v172, %v293
        %v295 = vand.u32 %v294, 4294901760
        %v296 = vsub.f32 %v294, %v295
        %v297 = vand.u32 %v296, 4294901760
        %298 = vmatpush1.msra.mxu0 %v297
        %299 = vmatprep.subr.mxu0 0.0
        %v300 = vand.u32 %v171, 4294901760
        %v301 = vsub.f32 %v171, %v300
        %v302 = vand.u32 %v301, 4294901760
        %v303 = vsub.f32 %v301, %v302
        %v304 = vand.u32 %v303, 4294901760
        %305 = vmatpush1.msra.mxu0 %v304
        %306 = vmatprep.subr.mxu0 0.0
        %v307 = vand.u32 %v170, 4294901760
        %v308 = vsub.f32 %v170, %v307
        %v309 = vand.u32 %v308, 4294901760
        %v310 = vsub.f32 %v308, %v309
        %v311 = vand.u32 %v310, 4294901760
        %312 = vmatpush1.msra.mxu0 %v311
        %313 = vmatprep.subr.mxu0 0.0
        %v314 = vand.u32 %v169, 4294901760
        %v315 = vsub.f32 %v169, %v314
        %v316 = vand.u32 %v315, 4294901760
        %v317 = vsub.f32 %v315, %v316
        %v318 = vand.u32 %v317, 4294901760
        %319 = vmatpush1.msra.mxu0 %v318
        %320 = vmatprep.subr.mxu0 0.0
        %v321 = vand.u32 %v168, 4294901760
        %v322 = vsub.f32 %v168, %v321
        %v323 = vand.u32 %v322, 4294901760
        %v324 = vsub.f32 %v322, %v323
        %v325 = vand.u32 %v324, 4294901760
        %326 = vmatpush1.msra.mxu0 %v325
        %327 = vmatprep.subr.mxu0 0.0
        %v328 = vand.u32 %v167, 4294901760
        %v329 = vsub.f32 %v167, %v328
        %v330 = vand.u32 %v329, 4294901760
        %v331 = vsub.f32 %v329, %v330
        %v332 = vand.u32 %v331, 4294901760
        %333 = vmatpush1.msra.mxu0 %v332
        %334 = vmatprep.subr.mxu0 0.0
        %335 = vmatpush2.msra.mxu0 0.0
        %336 = vmatprep.subr.mxu0 0.0
        %337 = vmatpush2.msra.mxu0 0.0
        %338 = vmatprep.subr.mxu0 0.0
        %339 = vmatpush2.msra.mxu0 0.0
        %340 = vmatprep.subr.mxu0 0.0
        %341 = vmatpush2.msra.mxu0 0.0
        %342 = vmatprep.subr.mxu0 0.0
        %343 = vmatpush2.msra.mxu0 0.0
        %344 = vmatprep.subr.mxu0 0.0
        %345 = vmatpush2.msra.mxu0 0.0
        %346 = vmatprep.subr.mxu0 0.0
        %347 = vmatpush2.msra.mxu0 0.0
        %348 = vmatprep.subr.mxu0 0.0
        %349 = vmatpush2.msra.mxu0 0.0
        %350 = vmatprep.subr.mxu0 0.0
        %351 = vmatpush2.msra.mxu0 0.0
        %352 = vmatprep.subr.mxu0 0.0
        %353 = vmatpush2.msra.mxu0 0.0
        %354 = vmatprep.subr.mxu0 0.0
        %355 = vmatpush2.msra.mxu0 0.0
        %356 = vmatprep.subr.mxu0 0.0
        %357 = vmatpush2.msra.mxu0 0.0
        %358 = vmatprep.subr.mxu0 0.0
        %359 = vmatpush2.msra.mxu0 0.0
        %360 = vmatprep.subr.mxu0 0.0
        %361 = vmatpush2.msra.mxu0 0.0
        %362 = vmatprep.subr.mxu0 0.0
        %363 = vmatpush2.msra.mxu0 0.0
        %364 = vmatprep.subr.mxu0 0.0
        %365 = vmatpush2.msra.mxu0 0.0
        %366 = vmatprep.mubr.f32.mxu0 0.0
        %v367 = vand.u32 %v177, 4294901760
        %368 = vmatmul.mubr.f32.gmra.mxu0 %v367
        %v369 = vpop.f32.mrf.mxu0
        %v370 = vadd.f32 %v259, %v369
        %v371 = vpop.f32.mrf.mxu0
        %372 = vdwg.mxu0
        %373 = vmatprep.subr.mxu0 0.0
        %374 = vmatpush1.msra.mxu0 0.0
        %375 = vmatprep.subr.mxu0 0.0
        %376 = vmatpush1.msra.mxu0 0.0
        %377 = vmatprep.subr.mxu0 0.0
        %378 = vmatpush1.msra.mxu0 0.0
        %379 = vmatprep.subr.mxu0 0.0
        %380 = vmatpush1.msra.mxu0 0.0
        %381 = vmatprep.subr.mxu0 0.0
        %382 = vmatpush1.msra.mxu0 0.0
        %383 = vmatprep.subr.mxu0 0.0
        %384 = vmatpush1.msra.mxu0 0.0
        %385 = vmatprep.subr.mxu0 0.0
        %386 = vmatpush1.msra.mxu0 0.0
        %387 = vmatprep.subr.mxu0 0.0
        %388 = vmatpush1.msra.mxu0 0.0
        %389 = vmatprep.subr.mxu0 0.0
        %v390 = vand.u32 %v174, 4294901760
        %v391 = vsub.f32 %v174, %v390
        %392 = vmatpush1.msra.mxu0 %v391
        %393 = vmatprep.subr.mxu0 0.0
        %v394 = vand.u32 %v173, 4294901760
        %v395 = vsub.f32 %v173, %v394
        %396 = vmatpush1.msra.mxu0 %v395
        %397 = vmatprep.subr.mxu0 0.0
        %v398 = vand.u32 %v172, 4294901760
        %v399 = vsub.f32 %v172, %v398
        %400 = vmatpush1.msra.mxu0 %v399
        %401 = vmatprep.subr.mxu0 0.0
        %v402 = vand.u32 %v171, 4294901760
        %v403 = vsub.f32 %v171, %v402
        %404 = vmatpush1.msra.mxu0 %v403
        %405 = vmatprep.subr.mxu0 0.0
        %v406 = vand.u32 %v170, 4294901760
        %v407 = vsub.f32 %v170, %v406
        %408 = vmatpush1.msra.mxu0 %v407
        %409 = vmatprep.subr.mxu0 0.0
        %v410 = vand.u32 %v169, 4294901760
        %v411 = vsub.f32 %v169, %v410
        %412 = vmatpush1.msra.mxu0 %v411
        %413 = vmatprep.subr.mxu0 0.0
        %v414 = vand.u32 %v168, 4294901760
        %v415 = vsub.f32 %v168, %v414
        %416 = vmatpush1.msra.mxu0 %v415
        %417 = vmatprep.subr.mxu0 0.0
        %v418 = vand.u32 %v167, 4294901760
        %v419 = vsub.f32 %v167, %v418
        %420 = vmatpush1.msra.mxu0 %v419
        %421 = vmatprep.subr.mxu0 0.0
        %422 = vmatpush2.msra.mxu0 0.0
        %423 = vmatprep.subr.mxu0 0.0
        %424 = vmatpush2.msra.mxu0 0.0
        %425 = vmatprep.subr.mxu0 0.0
        %426 = vmatpush2.msra.mxu0 0.0
        %427 = vmatprep.subr.mxu0 0.0
        %428 = vmatpush2.msra.mxu0 0.0
        %429 = vmatprep.subr.mxu0 0.0
        %430 = vmatpush2.msra.mxu0 0.0
        %431 = vmatprep.subr.mxu0 0.0
        %432 = vmatpush2.msra.mxu0 0.0
        %433 = vmatprep.subr.mxu0 0.0
        %434 = vmatpush2.msra.mxu0 0.0
        %435 = vmatprep.subr.mxu0 0.0
        %436 = vmatpush2.msra.mxu0 0.0
        %437 = vmatprep.subr.mxu0 0.0
        %438 = vmatpush2.msra.mxu0 0.0
        %439 = vmatprep.subr.mxu0 0.0
        %440 = vmatpush2.msra.mxu0 0.0
        %441 = vmatprep.subr.mxu0 0.0
        %442 = vmatpush2.msra.mxu0 0.0
        %443 = vmatprep.subr.mxu0 0.0
        %444 = vmatpush2.msra.mxu0 0.0
        %445 = vmatprep.subr.mxu0 0.0
        %446 = vmatpush2.msra.mxu0 0.0
        %447 = vmatprep.subr.mxu0 0.0
        %448 = vmatpush2.msra.mxu0 0.0
        %449 = vmatprep.subr.mxu0 0.0
        %450 = vmatpush2.msra.mxu0 0.0
        %451 = vmatprep.subr.mxu0 0.0
        %452 = vmatpush2.msra.mxu0 0.0
        %453 = vmatprep.mubr.f32.mxu0 0.0
        %v454 = vand.u32 %v177, 4294901760
        %v455 = vsub.f32 %v177, %v454
        %456 = vmatmul.mubr.f32.gmra.mxu0 %v455
        %v457 = vpop.f32.mrf.mxu0
        %v458 = vadd.f32 %v370, %v457
        %v459 = vpop.f32.mrf.mxu0
        %460 = vdwg.mxu0
        %461 = vmatprep.subr.mxu0 0.0
        %462 = vmatpush1.msra.mxu0 0.0
        %463 = vmatprep.subr.mxu0 0.0
        %464 = vmatpush1.msra.mxu0 0.0
        %465 = vmatprep.subr.mxu0 0.0
        %466 = vmatpush1.msra.mxu0 0.0
        %467 = vmatprep.subr.mxu0 0.0
        %468 = vmatpush1.msra.mxu0 0.0
        %469 = vmatprep.subr.mxu0 0.0
        %470 = vmatpush1.msra.mxu0 0.0
        %471 = vmatprep.subr.mxu0 0.0
        %472 = vmatpush1.msra.mxu0 0.0
        %473 = vmatprep.subr.mxu0 0.0
        %474 = vmatpush1.msra.mxu0 0.0
        %475 = vmatprep.subr.mxu0 0.0
        %476 = vmatpush1.msra.mxu0 0.0
        %477 = vmatprep.subr.mxu0 0.0
        %v478 = vand.u32 %v174, 4294901760
        %479 = vmatpush1.msra.mxu0 %v478
        %480 = vmatprep.subr.mxu0 0.0
        %v481 = vand.u32 %v173, 4294901760
        %482 = vmatpush1.msra.mxu0 %v481
        %483 = vmatprep.subr.mxu0 0.0
        %v484 = vand.u32 %v172, 4294901760
        %485 = vmatpush1.msra.mxu0 %v484
        %486 = vmatprep.subr.mxu0 0.0
        %v487 = vand.u32 %v171, 4294901760
        %488 = vmatpush1.msra.mxu0 %v487
        %489 = vmatprep.subr.mxu0 0.0
        %v490 = vand.u32 %v170, 4294901760
        %491 = vmatpush1.msra.mxu0 %v490
        %492 = vmatprep.subr.mxu0 0.0
        %v493 = vand.u32 %v169, 4294901760
        %494 = vmatpush1.msra.mxu0 %v493
        %495 = vmatprep.subr.mxu0 0.0
        %v496 = vand.u32 %v168, 4294901760
        %497 = vmatpush1.msra.mxu0 %v496
        %498 = vmatprep.subr.mxu0 0.0
        %v499 = vand.u32 %v167, 4294901760
        %500 = vmatpush1.msra.mxu0 %v499
        %501 = vmatprep.subr.mxu0 0.0
        %502 = vmatpush2.msra.mxu0 0.0
        %503 = vmatprep.subr.mxu0 0.0
        %504 = vmatpush2.msra.mxu0 0.0
        %505 = vmatprep.subr.mxu0 0.0
        %506 = vmatpush2.msra.mxu0 0.0
        %507 = vmatprep.subr.mxu0 0.0
        %508 = vmatpush2.msra.mxu0 0.0
        %509 = vmatprep.subr.mxu0 0.0
        %510 = vmatpush2.msra.mxu0 0.0
        %511 = vmatprep.subr.mxu0 0.0
        %512 = vmatpush2.msra.mxu0 0.0
        %513 = vmatprep.subr.mxu0 0.0
        %514 = vmatpush2.msra.mxu0 0.0
        %515 = vmatprep.subr.mxu0 0.0
        %516 = vmatpush2.msra.mxu0 0.0
        %517 = vmatprep.subr.mxu0 0.0
        %518 = vmatpush2.msra.mxu0 0.0
        %519 = vmatprep.subr.mxu0 0.0
        %520 = vmatpush2.msra.mxu0 0.0
        %521 = vmatprep.subr.mxu0 0.0
        %522 = vmatpush2.msra.mxu0 0.0
        %523 = vmatprep.subr.mxu0 0.0
        %524 = vmatpush2.msra.mxu0 0.0
        %525 = vmatprep.subr.mxu0 0.0
        %526 = vmatpush2.msra.mxu0 0.0
        %527 = vmatprep.subr.mxu0 0.0
        %528 = vmatpush2.msra.mxu0 0.0
        %529 = vmatprep.subr.mxu0 0.0
        %530 = vmatpush2.msra.mxu0 0.0
        %531 = vmatprep.subr.mxu0 0.0
        %532 = vmatpush2.msra.mxu0 0.0
        %533 = vmatprep.mubr.f32.mxu0 0.0
        %v534 = vand.u32 %v177, 4294901760
        %v535 = vsub.f32 %v177, %v534
        %v536 = vand.u32 %v535, 4294901760
        %537 = vmatmul.mubr.f32.gmra.mxu0 %v536
        %v538 = vpop.f32.mrf.mxu0
        %v539 = vadd.f32 %v458, %v538
        %v540 = vpop.f32.mrf.mxu0
        %541 = vdwg.mxu0
        %542 = vmatprep.subr.mxu0 0.0
        %543 = vmatpush1.msra.mxu0 0.0
        %544 = vmatprep.subr.mxu0 0.0
        %545 = vmatpush1.msra.mxu0 0.0
        %546 = vmatprep.subr.mxu0 0.0
        %547 = vmatpush1.msra.mxu0 0.0
        %548 = vmatprep.subr.mxu0 0.0
        %549 = vmatpush1.msra.mxu0 0.0
        %550 = vmatprep.subr.mxu0 0.0
        %551 = vmatpush1.msra.mxu0 0.0
        %552 = vmatprep.subr.mxu0 0.0
        %553 = vmatpush1.msra.mxu0 0.0
        %554 = vmatprep.subr.mxu0 0.0
        %555 = vmatpush1.msra.mxu0 0.0
        %556 = vmatprep.subr.mxu0 0.0
        %557 = vmatpush1.msra.mxu0 0.0
        %558 = vmatprep.subr.mxu0 0.0
        %v559 = vand.u32 %v174, 4294901760
        %v560 = vsub.f32 %v174, %v559
        %v561 = vand.u32 %v560, 4294901760
        %562 = vmatpush1.msra.mxu0 %v561
        %563 = vmatprep.subr.mxu0 0.0
        %v564 = vand.u32 %v173, 4294901760
        %v565 = vsub.f32 %v173, %v564
        %v566 = vand.u32 %v565, 4294901760
        %567 = vmatpush1.msra.mxu0 %v566
        %568 = vmatprep.subr.mxu0 0.0
        %v569 = vand.u32 %v172, 4294901760
        %v570 = vsub.f32 %v172, %v569
        %v571 = vand.u32 %v570, 4294901760
        %572 = vmatpush1.msra.mxu0 %v571
        %573 = vmatprep.subr.mxu0 0.0
        %v574 = vand.u32 %v171, 4294901760
        %v575 = vsub.f32 %v171, %v574
        %v576 = vand.u32 %v575, 4294901760
        %577 = vmatpush1.msra.mxu0 %v576
        %578 = vmatprep.subr.mxu0 0.0
        %v579 = vand.u32 %v170, 4294901760
        %v580 = vsub.f32 %v170, %v579
        %v581 = vand.u32 %v580, 4294901760
        %582 = vmatpush1.msra.mxu0 %v581
        %583 = vmatprep.subr.mxu0 0.0
        %v584 = vand.u32 %v169, 4294901760
        %v585 = vsub.f32 %v169, %v584
        %v586 = vand.u32 %v585, 4294901760
        %587 = vmatpush1.msra.mxu0 %v586
        %588 = vmatprep.subr.mxu0 0.0
        %v589 = vand.u32 %v168, 4294901760
        %v590 = vsub.f32 %v168, %v589
        %v591 = vand.u32 %v590, 4294901760
        %592 = vmatpush1.msra.mxu0 %v591
        %593 = vmatprep.subr.mxu0 0.0
        %v594 = vand.u32 %v167, 4294901760
        %v595 = vsub.f32 %v167, %v594
        %v596 = vand.u32 %v595, 4294901760
        %597 = vmatpush1.msra.mxu0 %v596
        %598 = vmatprep.subr.mxu0 0.0
        %599 = vmatpush2.msra.mxu0 0.0
        %600 = vmatprep.subr.mxu0 0.0
        %601 = vmatpush2.msra.mxu0 0.0
        %602 = vmatprep.subr.mxu0 0.0
        %603 = vmatpush2.msra.mxu0 0.0
        %604 = vmatprep.subr.mxu0 0.0
        %605 = vmatpush2.msra.mxu0 0.0
        %606 = vmatprep.subr.mxu0 0.0
        %607 = vmatpush2.msra.mxu0 0.0
        %608 = vmatprep.subr.mxu0 0.0
        %609 = vmatpush2.msra.mxu0 0.0
        %610 = vmatprep.subr.mxu0 0.0
        %611 = vmatpush2.msra.mxu0 0.0
        %612 = vmatprep.subr.mxu0 0.0
        %613 = vmatpush2.msra.mxu0 0.0
        %614 = vmatprep.subr.mxu0 0.0
        %615 = vmatpush2.msra.mxu0 0.0
        %616 = vmatprep.subr.mxu0 0.0
        %617 = vmatpush2.msra.mxu0 0.0
        %618 = vmatprep.subr.mxu0 0.0
        %619 = vmatpush2.msra.mxu0 0.0
        %620 = vmatprep.subr.mxu0 0.0
        %621 = vmatpush2.msra.mxu0 0.0
        %622 = vmatprep.subr.mxu0 0.0
        %623 = vmatpush2.msra.mxu0 0.0
        %624 = vmatprep.subr.mxu0 0.0
        %625 = vmatpush2.msra.mxu0 0.0
        %626 = vmatprep.subr.mxu0 0.0
        %627 = vmatpush2.msra.mxu0 0.0
        %628 = vmatprep.subr.mxu0 0.0
        %629 = vmatpush2.msra.mxu0 0.0
        %630 = vmatprep.mubr.f32.mxu0 0.0
        %v631 = vand.u32 %v177, 4294901760
        %632 = vmatmul.mubr.f32.gmra.mxu0 %v631
        %v633 = vpop.f32.mrf.mxu0
        %v634 = vadd.f32 %v539, %v633
        %v635 = vpop.f32.mrf.mxu0
        %636 = vdwg.mxu0
        %637 = vmatprep.subr.mxu0 0.0
        %638 = vmatpush1.msra.mxu0 0.0
        %639 = vmatprep.subr.mxu0 0.0
        %640 = vmatpush1.msra.mxu0 0.0
        %641 = vmatprep.subr.mxu0 0.0
        %642 = vmatpush1.msra.mxu0 0.0
        %643 = vmatprep.subr.mxu0 0.0
        %644 = vmatpush1.msra.mxu0 0.0
        %645 = vmatprep.subr.mxu0 0.0
        %646 = vmatpush1.msra.mxu0 0.0
        %647 = vmatprep.subr.mxu0 0.0
        %648 = vmatpush1.msra.mxu0 0.0
        %649 = vmatprep.subr.mxu0 0.0
        %650 = vmatpush1.msra.mxu0 0.0
        %651 = vmatprep.subr.mxu0 0.0
        %652 = vmatpush1.msra.mxu0 0.0
        %653 = vmatprep.subr.mxu0 0.0
        %v654 = vand.u32 %v174, 4294901760
        %655 = vmatpush1.msra.mxu0 %v654
        %656 = vmatprep.subr.mxu0 0.0
        %v657 = vand.u32 %v173, 4294901760
        %658 = vmatpush1.msra.mxu0 %v657
        %659 = vmatprep.subr.mxu0 0.0
        %v660 = vand.u32 %v172, 4294901760
        %661 = vmatpush1.msra.mxu0 %v660
        %662 = vmatprep.subr.mxu0 0.0
        %v663 = vand.u32 %v171, 4294901760
        %664 = vmatpush1.msra.mxu0 %v663
        %665 = vmatprep.subr.mxu0 0.0
        %v666 = vand.u32 %v170, 4294901760
        %667 = vmatpush1.msra.mxu0 %v666
        %668 = vmatprep.subr.mxu0 0.0
        %v669 = vand.u32 %v169, 4294901760
        %670 = vmatpush1.msra.mxu0 %v669
        %671 = vmatprep.subr.mxu0 0.0
        %v672 = vand.u32 %v168, 4294901760
        %673 = vmatpush1.msra.mxu0 %v672
        %674 = vmatprep.subr.mxu0 0.0
        %v675 = vand.u32 %v167, 4294901760
        %676 = vmatpush1.msra.mxu0 %v675
        %677 = vmatprep.subr.mxu0 0.0
        %678 = vmatpush2.msra.mxu0 0.0
        %679 = vmatprep.subr.mxu0 0.0
        %680 = vmatpush2.msra.mxu0 0.0
        %681 = vmatprep.subr.mxu0 0.0
        %682 = vmatpush2.msra.mxu0 0.0
        %683 = vmatprep.subr.mxu0 0.0
        %684 = vmatpush2.msra.mxu0 0.0
        %685 = vmatprep.subr.mxu0 0.0
        %686 = vmatpush2.msra.mxu0 0.0
        %687 = vmatprep.subr.mxu0 0.0
        %688 = vmatpush2.msra.mxu0 0.0
        %689 = vmatprep.subr.mxu0 0.0
        %690 = vmatpush2.msra.mxu0 0.0
        %691 = vmatprep.subr.mxu0 0.0
        %692 = vmatpush2.msra.mxu0 0.0
        %693 = vmatprep.subr.mxu0 0.0
        %694 = vmatpush2.msra.mxu0 0.0
        %695 = vmatprep.subr.mxu0 0.0
        %696 = vmatpush2.msra.mxu0 0.0
        %697 = vmatprep.subr.mxu0 0.0
        %698 = vmatpush2.msra.mxu0 0.0
        %699 = vmatprep.subr.mxu0 0.0
        %700 = vmatpush2.msra.mxu0 0.0
        %701 = vmatprep.subr.mxu0 0.0
        %702 = vmatpush2.msra.mxu0 0.0
        %703 = vmatprep.subr.mxu0 0.0
        %704 = vmatpush2.msra.mxu0 0.0
        %705 = vmatprep.subr.mxu0 0.0
        %706 = vmatpush2.msra.mxu0 0.0
        %707 = vmatprep.subr.mxu0 0.0
        %708 = vmatpush2.msra.mxu0 0.0
        %709 = vmatprep.mubr.f32.mxu0 0.0
        %v710 = vand.u32 %v177, 4294901760
        %711 = vmatmul.mubr.f32.gmra.mxu0 %v710
        %v712 = vpop.f32.mrf.mxu0
        %v713 = vadd.f32 %v634, %v712
        %v714 = vpop.f32.mrf.mxu0
        %715 = vdwg.mxu0
        %v716 = vmax.f32 %v713, 0.0
        %v717 = vld [vmem:[%s2] sm:$0xff]
        %v718 = vld [vmem:[%s2 + $0x8] sm:$0xff]
        %v719 = vld [vmem:[%s2 + $0x10] sm:$0xff]
        %v720 = vld [vmem:[%s2 + $0x18] sm:$0xff]
        %v721 = vld [vmem:[%s2 + $0x20] sm:$0xff]
        %v722 = vld [vmem:[%s2 + $0x28] sm:$0xff]
        %v723 = vld [vmem:[%s2 + $0x30] sm:$0xff]
        %v724 = vld [vmem:[%s2 + $0x38] sm:$0xff]
        %v725 = vld [vmem:[%s2 + $0x40] sm:$0xff]
        %v726 = vld [vmem:[%s2 + $0x48] sm:$0xff]
        %v727 = vld [vmem:[%s2 + $0x50] sm:$0xff]
        %v728 = vld [vmem:[%s2 + $0x58] sm:$0xff]
        %v729 = vld [vmem:[%s2 + $0x60] sm:$0xff]
        %v730 = vld [vmem:[%s2 + $0x68] sm:$0xff]
        %v731 = vld [vmem:[%s2 + $0x70] sm:$0xff]
        %v732 = vld [vmem:[%s2 + $0x78] sm:$0xff]
        %733 = vmatprep.subr.mxu0 0.0
        %v734 = vand.u32 %v732, 4294901760
        %735 = vmatpush1.msra.mxu0 %v734
        %736 = vmatprep.subr.mxu0 0.0
        %v737 = vand.u32 %v731, 4294901760
        %738 = vmatpush1.msra.mxu0 %v737
        %739 = vmatprep.subr.mxu0 0.0
        %v740 = vand.u32 %v730, 4294901760
        %741 = vmatpush1.msra.mxu0 %v740
        %742 = vmatprep.subr.mxu0 0.0
        %v743 = vand.u32 %v729, 4294901760
        %744 = vmatpush1.msra.mxu0 %v743
        %745 = vmatprep.subr.mxu0 0.0
        %v746 = vand.u32 %v728, 4294901760
        %747 = vmatpush1.msra.mxu0 %v746
        %748 = vmatprep.subr.mxu0 0.0
        %v749 = vand.u32 %v727, 4294901760
        %750 = vmatpush1.msra.mxu0 %v749
        %751 = vmatprep.subr.mxu0 0.0
        %v752 = vand.u32 %v726, 4294901760
        %753 = vmatpush1.msra.mxu0 %v752
        %754 = vmatprep.subr.mxu0 0.0
        %v755 = vand.u32 %v725, 4294901760
        %756 = vmatpush1.msra.mxu0 %v755
        %757 = vmatprep.subr.mxu0 0.0
        %v758 = vand.u32 %v724, 4294901760
        %759 = vmatpush1.msra.mxu0 %v758
        %760 = vmatprep.subr.mxu0 0.0
        %v761 = vand.u32 %v723, 4294901760
        %762 = vmatpush1.msra.mxu0 %v761
        %763 = vmatprep.subr.mxu0 0.0
        %v764 = vand.u32 %v722, 4294901760
        %765 = vmatpush1.msra.mxu0 %v764
        %766 = vmatprep.subr.mxu0 0.0
        %v767 = vand.u32 %v721, 4294901760
        %768 = vmatpush1.msra.mxu0 %v767
        %769 = vmatprep.subr.mxu0 0.0
        %v770 = vand.u32 %v720, 4294901760
        %771 = vmatpush1.msra.mxu0 %v770
        %772 = vmatprep.subr.mxu0 0.0
        %v773 = vand.u32 %v719, 4294901760
        %774 = vmatpush1.msra.mxu0 %v773
        %775 = vmatprep.subr.mxu0 0.0
        %v776 = vand.u32 %v718, 4294901760
        %777 = vmatpush1.msra.mxu0 %v776
        %778 = vmatprep.subr.mxu0 0.0
        %v779 = vand.u32 %v717, 4294901760
        %780 = vmatpush1.msra.mxu0 %v779
        %781 = vmatprep.subr.mxu0 0.0
        %782 = vmatpush2.msra.mxu0 0.0
        %783 = vmatprep.subr.mxu0 0.0
        %784 = vmatpush2.msra.mxu0 0.0
        %785 = vmatprep.subr.mxu0 0.0
        %786 = vmatpush2.msra.mxu0 0.0
        %787 = vmatprep.subr.mxu0 0.0
        %788 = vmatpush2.msra.mxu0 0.0
        %789 = vmatprep.subr.mxu0 0.0
        %790 = vmatpush2.msra.mxu0 0.0
        %791 = vmatprep.subr.mxu0 0.0
        %792 = vmatpush2.msra.mxu0 0.0
        %793 = vmatprep.subr.mxu0 0.0
        %794 = vmatpush2.msra.mxu0 0.0
        %795 = vmatprep.subr.mxu0 0.0
        %796 = vmatpush2.msra.mxu0 0.0
        %797 = vmatprep.subr.mxu0 0.0
        %798 = vmatpush2.msra.mxu0 0.0
        %799 = vmatprep.subr.mxu0 0.0
        %800 = vmatpush2.msra.mxu0 0.0
        %801 = vmatprep.subr.mxu0 0.0
        %802 = vmatpush2.msra.mxu0 0.0
        %803 = vmatprep.subr.mxu0 0.0
        %804 = vmatpush2.msra.mxu0 0.0
        %805 = vmatprep.subr.mxu0 0.0
        %806 = vmatpush2.msra.mxu0 0.0
        %807 = vmatprep.subr.mxu0 0.0
        %808 = vmatpush2.msra.mxu0 0.0
        %809 = vmatprep.subr.mxu0 0.0
        %810 = vmatpush2.msra.mxu0 0.0
        %811 = vmatprep.subr.mxu0 0.0
        %812 = vmatpush2.msra.mxu0 0.0
        %813 = vmatprep.mubr.f32.mxu0 0.0
        %v814 = vand.u32 %v716, 4294901760
        %v815 = vsub.f32 %v716, %v814
        %v816 = vand.u32 %v815, 4294901760
        %v817 = vsub.f32 %v815, %v816
        %v818 = vand.u32 %v817, 4294901760
        %819 = vmatmul.mubr.f32.gmra.mxu0 %v818
        %v820 = vpop.f32.mrf.mxu0
        %v821 = vadd.f32 0.0, %v820
        %v822 = vpop.f32.mrf.mxu0
        %823 = vdwg.mxu0
        %824 = vmatprep.subr.mxu0 0.0
        %v825 = vand.u32 %v732, 4294901760
        %v826 = vsub.f32 %v732, %v825
        %v827 = vand.u32 %v826, 4294901760
        %v828 = vsub.f32 %v826, %v827
        %v829 = vand.u32 %v828, 4294901760
        %830 = vmatpush1.msra.mxu0 %v829
        %831 = vmatprep.subr.mxu0 0.0
        %v832 = vand.u32 %v731, 4294901760
        %v833 = vsub.f32 %v731, %v832
        %v834 = vand.u32 %v833, 4294901760
        %v835 = vsub.f32 %v833, %v834
        %v836 = vand.u32 %v835, 4294901760
        %837 = vmatpush1.msra.mxu0 %v836
        %838 = vmatprep.subr.mxu0 0.0
        %v839 = vand.u32 %v730, 4294901760
        %v840 = vsub.f32 %v730, %v839
        %v841 = vand.u32 %v840, 4294901760
        %v842 = vsub.f32 %v840, %v841
        %v843 = vand.u32 %v842, 4294901760
        %844 = vmatpush1.msra.mxu0 %v843
        %845 = vmatprep.subr.mxu0 0.0
        %v846 = vand.u32 %v729, 4294901760
        %v847 = vsub.f32 %v729, %v846
        %v848 = vand.u32 %v847, 4294901760
        %v849 = vsub.f32 %v847, %v848
        %v850 = vand.u32 %v849, 4294901760
        %851 = vmatpush1.msra.mxu0 %v850
        %852 = vmatprep.subr.mxu0 0.0
        %v853 = vand.u32 %v728, 4294901760
        %v854 = vsub.f32 %v728, %v853
        %v855 = vand.u32 %v854, 4294901760
        %v856 = vsub.f32 %v854, %v855
        %v857 = vand.u32 %v856, 4294901760
        %858 = vmatpush1.msra.mxu0 %v857
        %859 = vmatprep.subr.mxu0 0.0
        %v860 = vand.u32 %v727, 4294901760
        %v861 = vsub.f32 %v727, %v860
        %v862 = vand.u32 %v861, 4294901760
        %v863 = vsub.f32 %v861, %v862
        %v864 = vand.u32 %v863, 4294901760
        %865 = vmatpush1.msra.mxu0 %v864
        %866 = vmatprep.subr.mxu0 0.0
        %v867 = vand.u32 %v726, 4294901760
        %v868 = vsub.f32 %v726, %v867
        %v869 = vand.u32 %v868, 4294901760
        %v870 = vsub.f32 %v868, %v869
        %v871 = vand.u32 %v870, 4294901760
        %872 = vmatpush1.msra.mxu0 %v871
        %873 = vmatprep.subr.mxu0 0.0
        %v874 = vand.u32 %v725, 4294901760
        %v875 = vsub.f32 %v725, %v874
        %v876 = vand.u32 %v875, 4294901760
        %v877 = vsub.f32 %v875, %v876
        %v878 = vand.u32 %v877, 4294901760
        %879 = vmatpush1.msra.mxu0 %v878
        %880 = vmatprep.subr.mxu0 0.0
        %v881 = vand.u32 %v724, 4294901760
        %v882 = vsub.f32 %v724, %v881
        %v883 = vand.u32 %v882, 4294901760
        %v884 = vsub.f32 %v882, %v883
        %v885 = vand.u32 %v884, 4294901760
        %886 = vmatpush1.msra.mxu0 %v885
        %887 = vmatprep.subr.mxu0 0.0
        %v888 = vand.u32 %v723, 4294901760
        %v889 = vsub.f32 %v723, %v888
        %v890 = vand.u32 %v889, 4294901760
        %v891 = vsub.f32 %v889, %v890
        %v892 = vand.u32 %v891, 4294901760
        %893 = vmatpush1.msra.mxu0 %v892
        %894 = vmatprep.subr.mxu0 0.0
        %v895 = vand.u32 %v722, 4294901760
        %v896 = vsub.f32 %v722, %v895
        %v897 = vand.u32 %v896, 4294901760
        %v898 = vsub.f32 %v896, %v897
        %v899 = vand.u32 %v898, 4294901760
        %900 = vmatpush1.msra.mxu0 %v899
        %901 = vmatprep.subr.mxu0 0.0
        %v902 = vand.u32 %v721, 4294901760
        %v903 = vsub.f32 %v721, %v902
        %v904 = vand.u32 %v903, 4294901760
        %v905 = vsub.f32 %v903, %v904
        %v906 = vand.u32 %v905, 4294901760
        %907 = vmatpush1.msra.mxu0 %v906
        %908 = vmatprep.subr.mxu0 0.0
        %v909 = vand.u32 %v720, 4294901760
        %v910 = vsub.f32 %v720, %v909
        %v911 = vand.u32 %v910, 4294901760
        %v912 = vsub.f32 %v910, %v911
        %v913 = vand.u32 %v912, 4294901760
        %914 = vmatpush1.msra.mxu0 %v913
        %915 = vmatprep.subr.mxu0 0.0
        %v916 = vand.u32 %v719, 4294901760
        %v917 = vsub.f32 %v719, %v916
        %v918 = vand.u32 %v917, 4294901760
        %v919 = vsub.f32 %v917, %v918
        %v920 = vand.u32 %v919, 4294901760
        %921 = vmatpush1.msra.mxu0 %v920
        %922 = vmatprep.subr.mxu0 0.0
        %v923 = vand.u32 %v718, 4294901760
        %v924 = vsub.f32 %v718, %v923
        %v925 = vand.u32 %v924, 4294901760
        %v926 = vsub.f32 %v924, %v925
        %v927 = vand.u32 %v926, 4294901760
        %928 = vmatpush1.msra.mxu0 %v927
        %929 = vmatprep.subr.mxu0 0.0
        %v930 = vand.u32 %v717, 4294901760
        %v931 = vsub.f32 %v717, %v930
        %v932 = vand.u32 %v931, 4294901760
        %v933 = vsub.f32 %v931, %v932
        %v934 = vand.u32 %v933, 4294901760
        %935 = vmatpush1.msra.mxu0 %v934
        %936 = vmatprep.subr.mxu0 0.0
        %937 = vmatpush2.msra.mxu0 0.0
        %938 = vmatprep.subr.mxu0 0.0
        %939 = vmatpush2.msra.mxu0 0.0
        %940 = vmatprep.subr.mxu0 0.0
        %941 = vmatpush2.msra.mxu0 0.0
        %942 = vmatprep.subr.mxu0 0.0
        %943 = vmatpush2.msra.mxu0 0.0
        %944 = vmatprep.subr.mxu0 0.0
        %945 = vmatpush2.msra.mxu0 0.0
        %946 = vmatprep.subr.mxu0 0.0
        %947 = vmatpush2.msra.mxu0 0.0
        %948 = vmatprep.subr.mxu0 0.0
        %949 = vmatpush2.msra.mxu0 0.0
        %950 = vmatprep.subr.mxu0 0.0
        %951 = vmatpush2.msra.mxu0 0.0
        %952 = vmatprep.subr.mxu0 0.0
        %953 = vmatpush2.msra.mxu0 0.0
        %954 = vmatprep.subr.mxu0 0.0
        %955 = vmatpush2.msra.mxu0 0.0
        %956 = vmatprep.subr.mxu0 0.0
        %957 = vmatpush2.msra.mxu0 0.0
        %958 = vmatprep.subr.mxu0 0.0
        %959 = vmatpush2.msra.mxu0 0.0
        %960 = vmatprep.subr.mxu0 0.0
        %961 = vmatpush2.msra.mxu0 0.0
        %962 = vmatprep.subr.mxu0 0.0
        %963 = vmatpush2.msra.mxu0 0.0
        %964 = vmatprep.subr.mxu0 0.0
        %965 = vmatpush2.msra.mxu0 0.0
        %966 = vmatprep.subr.mxu0 0.0
        %967 = vmatpush2.msra.mxu0 0.0
        %968 = vmatprep.mubr.f32.mxu0 0.0
        %v969 = vand.u32 %v716, 4294901760
        %970 = vmatmul.mubr.f32.gmra.mxu0 %v969
        %v971 = vpop.f32.mrf.mxu0
        %v972 = vadd.f32 %v821, %v971
        %v973 = vpop.f32.mrf.mxu0
        %974 = vdwg.mxu0
        %975 = vmatprep.subr.mxu0 0.0
        %v976 = vand.u32 %v732, 4294901760
        %v977 = vsub.f32 %v732, %v976
        %978 = vmatpush1.msra.mxu0 %v977
        %979 = vmatprep.subr.mxu0 0.0
        %v980 = vand.u32 %v731, 4294901760
        %v981 = vsub.f32 %v731, %v980
        %982 = vmatpush1.msra.mxu0 %v981
        %983 = vmatprep.subr.mxu0 0.0
        %v984 = vand.u32 %v730, 4294901760
        %v985 = vsub.f32 %v730, %v984
        %986 = vmatpush1.msra.mxu0 %v985
        %987 = vmatprep.subr.mxu0 0.0
        %v988 = vand.u32 %v729, 4294901760
        %v989 = vsub.f32 %v729, %v988
        %990 = vmatpush1.msra.mxu0 %v989
        %991 = vmatprep.subr.mxu0 0.0
        %v992 = vand.u32 %v728, 4294901760
        %v993 = vsub.f32 %v728, %v992
        %994 = vmatpush1.msra.mxu0 %v993
        %995 = vmatprep.subr.mxu0 0.0
        %v996 = vand.u32 %v727, 4294901760
        %v997 = vsub.f32 %v727, %v996
        %998 = vmatpush1.msra.mxu0 %v997
        %999 = vmatprep.subr.mxu0 0.0
        %v1000 = vand.u32 %v726, 4294901760
        %v1001 = vsub.f32 %v726, %v1000
        %1002 = vmatpush1.msra.mxu0 %v1001
        %1003 = vmatprep.subr.mxu0 0.0
        %v1004 = vand.u32 %v725, 4294901760
        %v1005 = vsub.f32 %v725, %v1004
        %1006 = vmatpush1.msra.mxu0 %v1005
        %1007 = vmatprep.subr.mxu0 0.0
        %v1008 = vand.u32 %v724, 4294901760
        %v1009 = vsub.f32 %v724, %v1008
        %1010 = vmatpush1.msra.mxu0 %v1009
        %1011 = vmatprep.subr.mxu0 0.0
        %v1012 = vand.u32 %v723, 4294901760
        %v1013 = vsub.f32 %v723, %v1012
        %1014 = vmatpush1.msra.mxu0 %v1013
        %1015 = vmatprep.subr.mxu0 0.0
        %v1016 = vand.u32 %v722, 4294901760
        %v1017 = vsub.f32 %v722, %v1016
        %1018 = vmatpush1.msra.mxu0 %v1017
        %1019 = vmatprep.subr.mxu0 0.0
        %v1020 = vand.u32 %v721, 4294901760
        %v1021 = vsub.f32 %v721, %v1020
        %1022 = vmatpush1.msra.mxu0 %v1021
        %1023 = vmatprep.subr.mxu0 0.0
        %v1024 = vand.u32 %v720, 4294901760
        %v1025 = vsub.f32 %v720, %v1024
        %1026 = vmatpush1.msra.mxu0 %v1025
        %1027 = vmatprep.subr.mxu0 0.0
        %v1028 = vand.u32 %v719, 4294901760
        %v1029 = vsub.f32 %v719, %v1028
        %1030 = vmatpush1.msra.mxu0 %v1029
        %1031 = vmatprep.subr.mxu0 0.0
        %v1032 = vand.u32 %v718, 4294901760
        %v1033 = vsub.f32 %v718, %v1032
        %1034 = vmatpush1.msra.mxu0 %v1033
        %1035 = vmatprep.subr.mxu0 0.0
        %v1036 = vand.u32 %v717, 4294901760
        %v1037 = vsub.f32 %v717, %v1036
        %1038 = vmatpush1.msra.mxu0 %v1037
        %1039 = vmatprep.subr.mxu0 0.0
        %1040 = vmatpush2.msra.mxu0 0.0
        %1041 = vmatprep.subr.mxu0 0.0
        %1042 = vmatpush2.msra.mxu0 0.0
        %1043 = vmatprep.subr.mxu0 0.0
        %1044 = vmatpush2.msra.mxu0 0.0
        %1045 = vmatprep.subr.mxu0 0.0
        %1046 = vmatpush2.msra.mxu0 0.0
        %1047 = vmatprep.subr.mxu0 0.0
        %1048 = vmatpush2.msra.mxu0 0.0
        %1049 = vmatprep.subr.mxu0 0.0
        %1050 = vmatpush2.msra.mxu0 0.0
        %1051 = vmatprep.subr.mxu0 0.0
        %1052 = vmatpush2.msra.mxu0 0.0
        %1053 = vmatprep.subr.mxu0 0.0
        %1054 = vmatpush2.msra.mxu0 0.0
        %1055 = vmatprep.subr.mxu0 0.0
        %1056 = vmatpush2.msra.mxu0 0.0
        %1057 = vmatprep.subr.mxu0 0.0
        %1058 = vmatpush2.msra.mxu0 0.0
        %1059 = vmatprep.subr.mxu0 0.0
        %1060 = vmatpush2.msra.mxu0 0.0
        %1061 = vmatprep.subr.mxu0 0.0
        %1062 = vmatpush2.msra.mxu0 0.0
        %1063 = vmatprep.subr.mxu0 0.0
        %1064 = vmatpush2.msra.mxu0 0.0
        %1065 = vmatprep.subr.mxu0 0.0
        %1066 = vmatpush2.msra.mxu0 0.0
        %1067 = vmatprep.subr.mxu0 0.0
        %1068 = vmatpush2.msra.mxu0 0.0
        %1069 = vmatprep.subr.mxu0 0.0
        %1070 = vmatpush2.msra.mxu0 0.0
        %1071 = vmatprep.mubr.f32.mxu0 0.0
        %v1072 = vand.u32 %v716, 4294901760
        %v1073 = vsub.f32 %v716, %v1072
        %1074 = vmatmul.mubr.f32.gmra.mxu0 %v1073
        %v1075 = vpop.f32.mrf.mxu0
        %v1076 = vadd.f32 %v972, %v1075
        %v1077 = vpop.f32.mrf.mxu0
        %1078 = vdwg.mxu0
        %1079 = vmatprep.subr.mxu0 0.0
        %v1080 = vand.u32 %v732, 4294901760
        %1081 = vmatpush1.msra.mxu0 %v1080
        %1082 = vmatprep.subr.mxu0 0.0
        %v1083 = vand.u32 %v731, 4294901760
        %1084 = vmatpush1.msra.mxu0 %v1083
        %1085 = vmatprep.subr.mxu0 0.0
        %v1086 = vand.u32 %v730, 4294901760
        %1087 = vmatpush1.msra.mxu0 %v1086
        %1088 = vmatprep.subr.mxu0 0.0
        %v1089 = vand.u32 %v729, 4294901760
        %1090 = vmatpush1.msra.mxu0 %v1089
        %1091 = vmatprep.subr.mxu0 0.0
        %v1092 = vand.u32 %v728, 4294901760
        %1093 = vmatpush1.msra.mxu0 %v1092
        %1094 = vmatprep.subr.mxu0 0.0
        %v1095 = vand.u32 %v727, 4294901760
        %1096 = vmatpush1.msra.mxu0 %v1095
        %1097 = vmatprep.subr.mxu0 0.0
        %v1098 = vand.u32 %v726, 4294901760
        %1099 = vmatpush1.msra.mxu0 %v1098
        %1100 = vmatprep.subr.mxu0 0.0
        %v1101 = vand.u32 %v725, 4294901760
        %1102 = vmatpush1.msra.mxu0 %v1101
        %1103 = vmatprep.subr.mxu0 0.0
        %v1104 = vand.u32 %v724, 4294901760
        %1105 = vmatpush1.msra.mxu0 %v1104
        %1106 = vmatprep.subr.mxu0 0.0
        %v1107 = vand.u32 %v723, 4294901760
        %1108 = vmatpush1.msra.mxu0 %v1107
        %1109 = vmatprep.subr.mxu0 0.0
        %v1110 = vand.u32 %v722, 4294901760
        %1111 = vmatpush1.msra.mxu0 %v1110
        %1112 = vmatprep.subr.mxu0 0.0
        %v1113 = vand.u32 %v721, 4294901760
        %1114 = vmatpush1.msra.mxu0 %v1113
        %1115 = vmatprep.subr.mxu0 0.0
        %v1116 = vand.u32 %v720, 4294901760
        %1117 = vmatpush1.msra.mxu0 %v1116
        %1118 = vmatprep.subr.mxu0 0.0
        %v1119 = vand.u32 %v719, 4294901760
        %1120 = vmatpush1.msra.mxu0 %v1119
        %1121 = vmatprep.subr.mxu0 0.0
        %v1122 = vand.u32 %v718, 4294901760
        %1123 = vmatpush1.msra.mxu0 %v1122
        %1124 = vmatprep.subr.mxu0 0.0
        %v1125 = vand.u32 %v717, 4294901760
        %1126 = vmatpush1.msra.mxu0 %v1125
        %1127 = vmatprep.subr.mxu0 0.0
        %1128 = vmatpush2.msra.mxu0 0.0
        %1129 = vmatprep.subr.mxu0 0.0
        %1130 = vmatpush2.msra.mxu0 0.0
        %1131 = vmatprep.subr.mxu0 0.0
        %1132 = vmatpush2.msra.mxu0 0.0
        %1133 = vmatprep.subr.mxu0 0.0
        %1134 = vmatpush2.msra.mxu0 0.0
        %1135 = vmatprep.subr.mxu0 0.0
        %1136 = vmatpush2.msra.mxu0 0.0
        %1137 = vmatprep.subr.mxu0 0.0
        %1138 = vmatpush2.msra.mxu0 0.0
        %1139 = vmatprep.subr.mxu0 0.0
        %1140 = vmatpush2.msra.mxu0 0.0
        %1141 = vmatprep.subr.mxu0 0.0
        %1142 = vmatpush2.msra.mxu0 0.0
        %1143 = vmatprep.subr.mxu0 0.0
        %1144 = vmatpush2.msra.mxu0 0.0
        %1145 = vmatprep.subr.mxu0 0.0
        %1146 = vmatpush2.msra.mxu0 0.0
        %1147 = vmatprep.subr.mxu0 0.0
        %1148 = vmatpush2.msra.mxu0 0.0
        %1149 = vmatprep.subr.mxu0 0.0
        %1150 = vmatpush2.msra.mxu0 0.0
        %1151 = vmatprep.subr.mxu0 0.0
        %1152 = vmatpush2.msra.mxu0 0.0
        %1153 = vmatprep.subr.mxu0 0.0
        %1154 = vmatpush2.msra.mxu0 0.0
        %1155 = vmatprep.subr.mxu0 0.0
        %1156 = vmatpush2.msra.mxu0 0.0
        %1157 = vmatprep.subr.mxu0 0.0
        %1158 = vmatpush2.msra.mxu0 0.0
        %1159 = vmatprep.mubr.f32.mxu0 0.0
        %v1160 = vand.u32 %v716, 4294901760
        %v1161 = vsub.f32 %v716, %v1160
        %v1162 = vand.u32 %v1161, 4294901760
        %1163 = vmatmul.mubr.f32.gmra.mxu0 %v1162
        %v1164 = vpop.f32.mrf.mxu0
        %v1165 = vadd.f32 %v1076, %v1164
        %v1166 = vpop.f32.mrf.mxu0
        %1167 = vdwg.mxu0
        %1168 = vmatprep.subr.mxu0 0.0
        %v1169 = vand.u32 %v732, 4294901760
        %v1170 = vsub.f32 %v732, %v1169
        %v1171 = vand.u32 %v1170, 4294901760
        %1172 = vmatpush1.msra.mxu0 %v1171
        %1173 = vmatprep.subr.mxu0 0.0
        %v1174 = vand.u32 %v731, 4294901760
        %v1175 = vsub.f32 %v731, %v1174
        %v1176 = vand.u32 %v1175, 4294901760
        %1177 = vmatpush1.msra.mxu0 %v1176
        %1178 = vmatprep.subr.mxu0 0.0
        %v1179 = vand.u32 %v730, 4294901760
        %v1180 = vsub.f32 %v730, %v1179
        %v1181 = vand.u32 %v1180, 4294901760
        %1182 = vmatpush1.msra.mxu0 %v1181
        %1183 = vmatprep.subr.mxu0 0.0
        %v1184 = vand.u32 %v729, 4294901760
        %v1185 = vsub.f32 %v729, %v1184
        %v1186 = vand.u32 %v1185, 4294901760
        %1187 = vmatpush1.msra.mxu0 %v1186
        %1188 = vmatprep.subr.mxu0 0.0
        %v1189 = vand.u32 %v728, 4294901760
        %v1190 = vsub.f32 %v728, %v1189
        %v1191 = vand.u32 %v1190, 4294901760
        %1192 = vmatpush1.msra.mxu0 %v1191
        %1193 = vmatprep.subr.mxu0 0.0
        %v1194 = vand.u32 %v727, 4294901760
        %v1195 = vsub.f32 %v727, %v1194
        %v1196 = vand.u32 %v1195, 4294901760
        %1197 = vmatpush1.msra.mxu0 %v1196
        %1198 = vmatprep.subr.mxu0 0.0
        %v1199 = vand.u32 %v726, 4294901760
        %v1200 = vsub.f32 %v726, %v1199
        %v1201 = vand.u32 %v1200, 4294901760
        %1202 = vmatpush1.msra.mxu0 %v1201
        %1203 = vmatprep.subr.mxu0 0.0
        %v1204 = vand.u32 %v725, 4294901760
        %v1205 = vsub.f32 %v725, %v1204
        %v1206 = vand.u32 %v1205, 4294901760
        %1207 = vmatpush1.msra.mxu0 %v1206
        %1208 = vmatprep.subr.mxu0 0.0
        %v1209 = vand.u32 %v724, 4294901760
        %v1210 = vsub.f32 %v724, %v1209
        %v1211 = vand.u32 %v1210, 4294901760
        %1212 = vmatpush1.msra.mxu0 %v1211
        %1213 = vmatprep.subr.mxu0 0.0
        %v1214 = vand.u32 %v723, 4294901760
        %v1215 = vsub.f32 %v723, %v1214
        %v1216 = vand.u32 %v1215, 4294901760
        %1217 = vmatpush1.msra.mxu0 %v1216
        %1218 = vmatprep.subr.mxu0 0.0
        %v1219 = vand.u32 %v722, 4294901760
        %v1220 = vsub.f32 %v722, %v1219
        %v1221 = vand.u32 %v1220, 4294901760
        %1222 = vmatpush1.msra.mxu0 %v1221
        %1223 = vmatprep.subr.mxu0 0.0
        %v1224 = vand.u32 %v721, 4294901760
        %v1225 = vsub.f32 %v721, %v1224
        %v1226 = vand.u32 %v1225, 4294901760
        %1227 = vmatpush1.msra.mxu0 %v1226
        %1228 = vmatprep.subr.mxu0 0.0
        %v1229 = vand.u32 %v720, 4294901760
        %v1230 = vsub.f32 %v720, %v1229
        %v1231 = vand.u32 %v1230, 4294901760
        %1232 = vmatpush1.msra.mxu0 %v1231
        %1233 = vmatprep.subr.mxu0 0.0
        %v1234 = vand.u32 %v719, 4294901760
        %v1235 = vsub.f32 %v719, %v1234
        %v1236 = vand.u32 %v1235, 4294901760
        %1237 = vmatpush1.msra.mxu0 %v1236
        %1238 = vmatprep.subr.mxu0 0.0
        %v1239 = vand.u32 %v718, 4294901760
        %v1240 = vsub.f32 %v718, %v1239
        %v1241 = vand.u32 %v1240, 4294901760
        %1242 = vmatpush1.msra.mxu0 %v1241
        %1243 = vmatprep.subr.mxu0 0.0
        %v1244 = vand.u32 %v717, 4294901760
        %v1245 = vsub.f32 %v717, %v1244
        %v1246 = vand.u32 %v1245, 4294901760
        %1247 = vmatpush1.msra.mxu0 %v1246
        %1248 = vmatprep.subr.mxu0 0.0
        %1249 = vmatpush2.msra.mxu0 0.0
        %1250 = vmatprep.subr.mxu0 0.0
        %1251 = vmatpush2.msra.mxu0 0.0
        %1252 = vmatprep.subr.mxu0 0.0
        %1253 = vmatpush2.msra.mxu0 0.0
        %1254 = vmatprep.subr.mxu0 0.0
        %1255 = vmatpush2.msra.mxu0 0.0
        %1256 = vmatprep.subr.mxu0 0.0
        %1257 = vmatpush2.msra.mxu0 0.0
        %1258 = vmatprep.subr.mxu0 0.0
        %1259 = vmatpush2.msra.mxu0 0.0
        %1260 = vmatprep.subr.mxu0 0.0
        %1261 = vmatpush2.msra.mxu0 0.0
        %1262 = vmatprep.subr.mxu0 0.0
        %1263 = vmatpush2.msra.mxu0 0.0
        %1264 = vmatprep.subr.mxu0 0.0
        %1265 = vmatpush2.msra.mxu0 0.0
        %1266 = vmatprep.subr.mxu0 0.0
        %1267 = vmatpush2.msra.mxu0 0.0
        %1268 = vmatprep.subr.mxu0 0.0
        %1269 = vmatpush2.msra.mxu0 0.0
        %1270 = vmatprep.subr.mxu0 0.0
        %1271 = vmatpush2.msra.mxu0 0.0
        %1272 = vmatprep.subr.mxu0 0.0
        %1273 = vmatpush2.msra.mxu0 0.0
        %1274 = vmatprep.subr.mxu0 0.0
        %1275 = vmatpush2.msra.mxu0 0.0
        %1276 = vmatprep.subr.mxu0 0.0
        %1277 = vmatpush2.msra.mxu0 0.0
        %1278 = vmatprep.subr.mxu0 0.0
        %1279 = vmatpush2.msra.mxu0 0.0
        %1280 = vmatprep.mubr.f32.mxu0 0.0
        %v1281 = vand.u32 %v716, 4294901760
        %1282 = vmatmul.mubr.f32.gmra.mxu0 %v1281
        %v1283 = vpop.f32.mrf.mxu0
        %v1284 = vadd.f32 %v1165, %v1283
        %v1285 = vpop.f32.mrf.mxu0
        %1286 = vdwg.mxu0
        %1287 = vmatprep.subr.mxu0 0.0
        %v1288 = vand.u32 %v732, 4294901760
        %1289 = vmatpush1.msra.mxu0 %v1288
        %1290 = vmatprep.subr.mxu0 0.0
        %v1291 = vand.u32 %v731, 4294901760
        %1292 = vmatpush1.msra.mxu0 %v1291
        %1293 = vmatprep.subr.mxu0 0.0
        %v1294 = vand.u32 %v730, 4294901760
        %1295 = vmatpush1.msra.mxu0 %v1294
        %1296 = vmatprep.subr.mxu0 0.0
        %v1297 = vand.u32 %v729, 4294901760
        %1298 = vmatpush1.msra.mxu0 %v1297
        %1299 = vmatprep.subr.mxu0 0.0
        %v1300 = vand.u32 %v728, 4294901760
        %1301 = vmatpush1.msra.mxu0 %v1300
        %1302 = vmatprep.subr.mxu0 0.0
        %v1303 = vand.u32 %v727, 4294901760
        %1304 = vmatpush1.msra.mxu0 %v1303
        %1305 = vmatprep.subr.mxu0 0.0
        %v1306 = vand.u32 %v726, 4294901760
        %1307 = vmatpush1.msra.mxu0 %v1306
        %1308 = vmatprep.subr.mxu0 0.0
        %v1309 = vand.u32 %v725, 4294901760
        %1310 = vmatpush1.msra.mxu0 %v1309
        %1311 = vmatprep.subr.mxu0 0.0
        %v1312 = vand.u32 %v724, 4294901760
        %1313 = vmatpush1.msra.mxu0 %v1312
        %1314 = vmatprep.subr.mxu0 0.0
        %v1315 = vand.u32 %v723, 4294901760
        %1316 = vmatpush1.msra.mxu0 %v1315
        %1317 = vmatprep.subr.mxu0 0.0
        %v1318 = vand.u32 %v722, 4294901760
        %1319 = vmatpush1.msra.mxu0 %v1318
        %1320 = vmatprep.subr.mxu0 0.0
        %v1321 = vand.u32 %v721, 4294901760
        %1322 = vmatpush1.msra.mxu0 %v1321
        %1323 = vmatprep.subr.mxu0 0.0
        %v1324 = vand.u32 %v720, 4294901760
        %1325 = vmatpush1.msra.mxu0 %v1324
        %1326 = vmatprep.subr.mxu0 0.0
        %v1327 = vand.u32 %v719, 4294901760
        %1328 = vmatpush1.msra.mxu0 %v1327
        %1329 = vmatprep.subr.mxu0 0.0
        %v1330 = vand.u32 %v718, 4294901760
        %1331 = vmatpush1.msra.mxu0 %v1330
        %1332 = vmatprep.subr.mxu0 0.0
        %v1333 = vand.u32 %v717, 4294901760
        %1334 = vmatpush1.msra.mxu0 %v1333
        %1335 = vmatprep.subr.mxu0 0.0
        %1336 = vmatpush2.msra.mxu0 0.0
        %1337 = vmatprep.subr.mxu0 0.0
        %1338 = vmatpush2.msra.mxu0 0.0
        %1339 = vmatprep.subr.mxu0 0.0
        %1340 = vmatpush2.msra.mxu0 0.0
        %1341 = vmatprep.subr.mxu0 0.0
        %1342 = vmatpush2.msra.mxu0 0.0
        %1343 = vmatprep.subr.mxu0 0.0
        %1344 = vmatpush2.msra.mxu0 0.0
        %1345 = vmatprep.subr.mxu0 0.0
        %1346 = vmatpush2.msra.mxu0 0.0
        %1347 = vmatprep.subr.mxu0 0.0
        %1348 = vmatpush2.msra.mxu0 0.0
        %1349 = vmatprep.subr.mxu0 0.0
        %1350 = vmatpush2.msra.mxu0 0.0
        %1351 = vmatprep.subr.mxu0 0.0
        %1352 = vmatpush2.msra.mxu0 0.0
        %1353 = vmatprep.subr.mxu0 0.0
        %1354 = vmatpush2.msra.mxu0 0.0
        %1355 = vmatprep.subr.mxu0 0.0
        %1356 = vmatpush2.msra.mxu0 0.0
        %1357 = vmatprep.subr.mxu0 0.0
        %1358 = vmatpush2.msra.mxu0 0.0
        %1359 = vmatprep.subr.mxu0 0.0
        %1360 = vmatpush2.msra.mxu0 0.0
        %1361 = vmatprep.subr.mxu0 0.0
        %1362 = vmatpush2.msra.mxu0 0.0
        %1363 = vmatprep.subr.mxu0 0.0
        %1364 = vmatpush2.msra.mxu0 0.0
        %1365 = vmatprep.subr.mxu0 0.0
        %1366 = vmatpush2.msra.mxu0 0.0
        %1367 = vmatprep.mubr.f32.mxu0 0.0
        %v1368 = vand.u32 %v716, 4294901760
        %1369 = vmatmul.mubr.f32.gmra.mxu0 %v1368
        %v1370 = vpop.f32.mrf.mxu0
        %v1371 = vadd.f32 %v1284, %v1370
        %v1372 = vpop.f32.mrf.mxu0
        %1373 = vdwg.mxu0
        %v1374 = vmul.f32 %v1371, 0.5
        %v1375 = vtanh.pop %v1374
        %v1376 = vadd.f32 %v1375, 1.0
        %v1377 = vmul.f32 %v1376, 0.5
        %v1378 = vmul.f32 %v166, %v1377
        %1379 = vst.msk [vmem:[%s161] sm:$0xff] %vm175, %v1378
        %s1380 = sand.u32 %s93, 1
        %s1381 = scalar_lea.sflag [#allocation3], %s1380
        %s1382 = sand.u32 %s93, 1
        %s1383 = smul.addr %s1382, 8
        %s1384 = scalar_lea.vmem [#allocation2], %s1383
        // Predicated region
        $region33: #{tpu_custom_call.1} parent=31 // pred_check
          %p1385 = pneg %p103
        $region34: #{tpu_custom_call.1} parent=31 // pred_check_branch
          %1387 = sbr.rel (%p1385) target = $region36
        $region35: #{tpu_custom_call.1} parent=31 // pred_region
          %s1389 = ssub.s32 128, 128
          %1390 = vsyncadd %s1381, %s1389
          %s1391 = smul.addr %s17, 128
          %s1392 = scalar_lea.hbm %s3, %s1391
          %s1394 = sshll.u32 %s1384, 4
          %s1395 = int_to_ptr.vmem [resolvable:$true] %s1394
          %1397 = dma.vmem_to_hbm [thread:$0]  %s1395, 128, %s1392, %s1381
        $region36: #{tpu_custom_call.1} parent=31 // pred_fallthru
          _
      $region32: #{tpu_custom_call.1} parent=5 // pred_fallthru
        _
      %p1398 = scmp.le.s32.totalorder 2, %s12
      // Predicated region
      $region37: #{tpu_custom_call.1} parent=5 // pred_check
        %p1399 = pneg %p1398
      $region38: #{tpu_custom_call.1} parent=5 // pred_check_branch
        %1401 = sbr.rel (%p1399) target = $region40
      $region39: #{tpu_custom_call.1} parent=5 // pred_region
        %s1402 = ssub.s32 %s12, 2
        // Predicated region
        $region41: #{tpu_custom_call.1} parent=39 // pred_check
          %p1403 = pneg %p109
        $region42: #{tpu_custom_call.1} parent=39 // pred_check_branch
          %1405 = sbr.rel (%p1403) target = $region44
        $region43: #{tpu_custom_call.1} parent=39 // pred_region
          %s1406 = sand.u32 %s94, 1
          %s1407 = scalar_lea.sflag [#allocation3], %s1406
          %s1408 = sand.u32 %s94, 1
          %s1409 = smul.addr %s1408, 8
          %s1410 = scalar_lea.vmem [#allocation2], %s1409
          %1411 = dma.done %s1407, 128
        $region44: #{tpu_custom_call.1} parent=39 // pred_fallthru
          _
      $region40: #{tpu_custom_call.1} parent=5 // pred_fallthru
        _
    $region6: #{tpu_custom_call.1} parent=1 // loop_footer
      %s16 = sadd.s32 1, %s12
    $region7: #{tpu_custom_call.1} parent=1 // loop_footer_branch
      %11 = sbr.rel target = $region3
    $region8: #{tpu_custom_call.1} parent=1 // loop_exit
      _
    %1412 = vsyncpa [#allocation3], 1
    %s1413 = scalar_lea.sflag [#allocation3], 1
    %1414 = vsyncpa %s1413, 1

// kernel: tpu_custom_call.1
$region0: #{tpu_custom_call.1}
  #allocation0 [shape = 'u32[]', space=smem, size = 0x4, offset = 0x4, fixed_abs, tag = 'smem constant byte address 0x4 - core index']
  #allocation1 [shape = 'u32[144,128]{1,0:T(1,128)}', space=vmem, size = 0x12000, scoped, tag = 'internal scratch']
  %s0 = inlined_call_operand.vmem [shape: f32[16,64], index: 0, kind: input, shape index: {}]
  %s1 = inlined_call_operand.vmem [shape: f32[64,128], index: 1, kind: input, shape index: {}]
  %s2 = inlined_call_operand.vmem [shape: f32[128,64], index: 2, kind: input, shape index: {}]
  %s3 = inlined_call_operand.hbm [shape: f32[16,64], index: 3, kind: output, shape index: {}]
  %s4 = sld [smem:[#allocation0]]
  $region45: #{tpu_custom_call.1} parent=0
    _
  %s6 = ssub.s32 1, %s4
  %s7 = scalar_select 0, %s6, %s4
  $region1: #{tpu_custom_call.1} parent=0
    #allocation2 [shape = 'u8[8192]{0}', space=vmem, size = 0x2000, scoped, tag = 'output window, operand 0']
    #allocation3 [shape = 's32[2]{0}', space=sflag, size = 0x8, scoped, tag = 'scoped memory for tpu_custom_call.1']
    %8 = vsyncpa [#allocation3], 0
    %s9 = scalar_lea.sflag [#allocation3], 1
    %10 = vsyncpa %s9, 0
    loop: start=0, step=1, limit=4
    $region2: #{tpu_custom_call.1} parent=1 // loop_pre_header
      _
    $region3: #{tpu_custom_call.1} parent=1 // loop_header
      %s12 = sphi 0, %s16
      %p13 = scmp.ge.s32.totalorder %s12, 4
      %s22 = sphi 0, %s24
      %s25 = sphi 0, %s22
      %s26 = sphi 0, %s25
      %s42 = sphi 0, %s26
      %s46 = sphi 0, %s46
      %s48 = sphi 0, %s46
      %s49 = sphi 0, %s48
      %s63 = sphi 0, %s49
      %s67 = sphi 0, %s67
      %s69 = sphi 0, %s67
      %s70 = sphi 0, %s69
      %s84 = sphi 0, %s70
      %s90 = sphi 0, %s92
      %s93 = sphi 0, %s90
      %s94 = sphi 0, %s93
      %s110 = sphi 0, %s94
    $region4: #{tpu_custom_call.1} parent=1 // loop_header_branch
      %15 = sbr.rel (%p13) target = $region8
    $region5: #{tpu_custom_call.1} parent=1 // loop_body
      %s17 = ssub.s32 %s12, 1
      %s18 = ssub.s32 %s12, 2
      %s19 = sadd.s32 %s12, 1
      %s20 = ssub.s32 %s12, %s19
      %p21 = scmp.eq.s32.totalorder %s20, 0
      %s23 = sadd.s32 %s22, 1
      %s24 = scalar_select %p21, %s22, %s23
      %p27 = pneg %p21
      %p28 = scmp.eq.s32.totalorder %s12, 1
      %p29 = por %p27, %p28
      %p30 = scmp.ne.s32.totalorder %s22, %s25
      %p31 = scmp.eq.s32.totalorder %s12, 0
      %p32 = por %p30, %p31
      %p33 = scmp.ne.s32.totalorder %s22, %s25
      %p34 = scmp.eq.s32.totalorder %s17, 1
      %p35 = por %p33, %p34
      %p36 = scmp.ne.s32.totalorder %s25, %s26
      %p37 = scmp.eq.s32.totalorder %s17, 0
      %p38 = por %p36, %p37
      %p39 = scmp.ne.s32.totalorder %s25, %s26
      %p40 = scmp.eq.s32.totalorder %s18, 1
      %p41 = por %p39, %p40
      %p43 = scmp.ne.s32.totalorder %s26, %s42
      %p44 = scmp.eq.s32.totalorder %s18, 0
      %p45 = por %p43, %p44
      %s47 = sadd.s32 %s46, 1
      %p50 = scmp.eq.s32.totalorder %s12, 1
      %p51 = scmp.ne.s32.totalorder %s46, %s48
      %p52 = scmp.eq.s32.totalorder %s12, 0
      %p53 = por %p51, %p52
      %p54 = scmp.ne.s32.totalorder %s46, %s48
      %p55 = scmp.eq.s32.totalorder %s17, 1
      %p56 = por %p54, %p55
      %p57 = scmp.ne.s32.totalorder %s48, %s49
      %p58 = scmp.eq.s32.totalorder %s17, 0
      %p59 = por %p57, %p58
      %p60 = scmp.ne.s32.totalorder %s48, %s49
      %p61 = scmp.eq.s32.totalorder %s18, 1
      %p62 = por %p60, %p61
      %p64 = scmp.ne.s32.totalorder %s49, %s63
      %p65 = scmp.eq.s32.totalorder %s18, 0
      %p66 = por %p64, %p65
      %s68 = sadd.s32 %s67, 1
      %p71 = scmp.eq.s32.totalorder %s12, 1
      %p72 = scmp.ne.s32.totalorder %s67, %s69
      %p73 = scmp.eq.s32.totalorder %s12, 0
      %p74 = por %p72, %p73
      %p75 = scmp.ne.s32.totalorder %s67, %s69
      %p76 = scmp.eq.s32.totalorder %s17, 1
      %p77 = por %p75, %p76
      %p78 = scmp.ne.s32.totalorder %s69, %s70
      %p79 = scmp.eq.s32.totalorder %s17, 0
      %p80 = por %p78, %p79
      %p81 = scmp.ne.s32.totalorder %s69, %s70
      %p82 = scmp.eq.s32.totalorder %s18, 1
      %p83 = por %p81, %p82
      %p85 = scmp.ne.s32.totalorder %s70, %s84
      %p86 = scmp.eq.s32.totalorder %s18, 0
      %p87 = por %p85, %p86
      %s88 = ssub.s32 %s12, %s19
      %p89 = scmp.eq.s32.totalorder %s88, 0
      %s91 = sadd.s32 %s90, 1
      %s92 = scalar_select %p89, %s90, %s91
      %p95 = pneg %p89
      %p96 = scmp.eq.s32.totalorder %s12, 1
      %p97 = por %p95, %p96
      %p98 = scmp.ne.s32.totalorder %s90, %s93
      %p99 = scmp.eq.s32.totalorder %s12, 0
      %p100 = por %p98, %p99
      %p101 = scmp.ne.s32.totalorder %s90, %s93
      %p102 = scmp.eq.s32.totalorder %s17, 1
      %p103 = por %p101, %p102
      %p104 = scmp.ne.s32.totalorder %s93, %s94
      %p105 = scmp.eq.s32.totalorder %s17, 0
      %p106 = por %p104, %p105
      %p107 = scmp.ne.s32.totalorder %s93, %s94
      %p108 = scmp.eq.s32.totalorder %s18, 1
      %p109 = por %p107, %p108
      %p111 = scmp.ne.s32.totalorder %s94, %s110
      %p112 = scmp.eq.s32.totalorder %s18, 0
      %p113 = por %p111, %p112
      %p114 = scmp.le.s32.totalorder 1, %s12
      %p115 = scmp.lt.s32.totalorder %s12, 3
      %p116 = pnand %p114, %p115
      %p117 = pneg %p116
      // Predicated region
      $region9: #{tpu_custom_call.1} parent=5 // pred_check
        _
      $region10: #{tpu_custom_call.1} parent=5 // pred_check_branch
        %119 = sbr.rel (%p116) target = $region12
      $region11: #{tpu_custom_call.1} parent=5 // pred_region
        %s120 = ssub.s32 %s12, 1
        // Predicated region
        $region13: #{tpu_custom_call.1} parent=11 // pred_check
          %p121 = pneg %p59
        $region14: #{tpu_custom_call.1} parent=11 // pred_check_branch
          %123 = sbr.rel (%p121) target = $region16
        $region15: #{tpu_custom_call.1} parent=11 // pred_region
          _
        $region16: #{tpu_custom_call.1} parent=11 // pred_fallthru
          _
        // Predicated region
        $region17: #{tpu_custom_call.1} parent=11 // pred_check
          %p124 = pneg %p80
        $region18: #{tpu_custom_call.1} parent=11 // pred_check_branch
          %126 = sbr.rel (%p124) target = $region20
        $region19: #{tpu_custom_call.1} parent=11 // pred_region
          _
        $region20: #{tpu_custom_call.1} parent=11 // pred_fallthru
          _
      $region12: #{tpu_custom_call.1} parent=5 // pred_fallthru
        _
      %p127 = scmp.lt.s32.totalorder %s12, 2
      // Predicated region
      $region21: #{tpu_custom_call.1} parent=5 // pred_check
        %p128 = pneg %p127
      $region22: #{tpu_custom_call.1} parent=5 // pred_check_branch
        %130 = sbr.rel (%p128) target = $region24
      $region23: #{tpu_custom_call.1} parent=5 // pred_region
        // Predicated region
        $region25: #{tpu_custom_call.1} parent=23 // pred_check
          %p131 = pneg %p32
        $region26: #{tpu_custom_call.1} parent=23 // pred_check_branch
          %133 = sbr.rel (%p131) target = $region28
        $region27: #{tpu_custom_call.1} parent=23 // pred_region
          %p134 = scmp.lt.s32.totalorder %s12, 1
          %s135 = scalar_select %p134, %s12, 1
          %s136 = smul.addr %s135, 8
          %s137 = scalar_lea.vmem %s0, %s136
        $region28: #{tpu_custom_call.1} parent=23 // pred_fallthru
          _
      $region24: #{tpu_custom_call.1} parent=5 // pred_fallthru
        _
      %p138 = scmp.le.s32.totalorder 1, %s12
      %p139 = scmp.lt.s32.totalorder %s12, 3
      %p140 = pnand %p138, %p139
      %p141 = pneg %p140
      // Predicated region
      $region29: #{tpu_custom_call.1} parent=5 // pred_check
        _
      $region30: #{tpu_custom_call.1} parent=5 // pred_check_branch
        %143 = sbr.rel (%p140) target = $region32
      $region31: #{tpu_custom_call.1} parent=5 // pred_region
        %s144 = ssub.s32 %s12, 1
        %p145 = scmp.lt.s32.totalorder %s17, 1
        %s146 = scalar_select %p145, %s17, 1
        %s147 = smul.addr %s146, 8
        %s148 = scalar_lea.vmem %s0, %s147
        %p149 = pneg %p38
        %p150 = pneg %p35
        %p151 = pneg %p59
        %p152 = pneg %p56
        %p153 = pneg %p80
        %p154 = pneg %p77
        %p155 = pneg %p106
        %p156 = pneg %p103
        %s157 = sand.u32 %s93, 1
        %s158 = scalar_lea.sflag [#allocation3], %s157
        %s159 = sand.u32 %s93, 1
        %s160 = smul.addr %s159, 8
        %s161 = scalar_lea.vmem [#allocation2], %s160
        %p162 = scmp.lt.s32.totalorder %s17, 1
        %s163 = scalar_select %p162, %s17, 1
        %s164 = smul.addr %s163, 8
        %s165 = scalar_lea.vmem %s0, %s164
        %v166 = vld [vmem:[%s165] sm:$0xff]
        %v167 = vld [vmem:[%s1] sm:$0xff]
        %v168 = vld [vmem:[%s1 + $0x8] sm:$0xff]
        %v169 = vld [vmem:[%s1 + $0x10] sm:$0xff]
        %v170 = vld [vmem:[%s1 + $0x18] sm:$0xff]
        %v171 = vld [vmem:[%s1 + $0x20] sm:$0xff]
        %v172 = vld [vmem:[%s1 + $0x28] sm:$0xff]
        %v173 = vld [vmem:[%s1 + $0x30] sm:$0xff]
        %v174 = vld [vmem:[%s1 + $0x38] sm:$0xff]
        %vm175 = vcmask 523264
        %v177 = vsel %vm175, %v166, 0
        %179 = vmatprep.subr.mxu0 0.0
        %180 = vmatpush1.msra.mxu0 0.0
        %181 = vmatprep.subr.mxu0 0.0
        %182 = vmatpush1.msra.mxu0 0.0
        %183 = vmatprep.subr.mxu0 0.0
        %184 = vmatpush1.msra.mxu0 0.0
        %185 = vmatprep.subr.mxu0 0.0
        %186 = vmatpush1.msra.mxu0 0.0
        %187 = vmatprep.subr.mxu0 0.0
        %188 = vmatpush1.msra.mxu0 0.0
        %189 = vmatprep.subr.mxu0 0.0
        %190 = vmatpush1.msra.mxu0 0.0
        %191 = vmatprep.subr.mxu0 0.0
        %192 = vmatpush1.msra.mxu0 0.0
        %193 = vmatprep.subr.mxu0 0.0
        %194 = vmatpush1.msra.mxu0 0.0
        %195 = vmatprep.subr.mxu0 0.0
        %v196 = vand.u32 %v174, 4294901760
        %197 = vmatpush1.msra.mxu0 %v196
        %198 = vmatprep.subr.mxu0 0.0
        %v199 = vand.u32 %v173, 4294901760
        %200 = vmatpush1.msra.mxu0 %v199
        %201 = vmatprep.subr.mxu0 0.0
        %v202 = vand.u32 %v172, 4294901760
        %203 = vmatpush1.msra.mxu0 %v202
        %204 = vmatprep.subr.mxu0 0.0
        %v205 = vand.u32 %v171, 4294901760
        %206 = vmatpush1.msra.mxu0 %v205
        %207 = vmatprep.subr.mxu0 0.0
        %v208 = vand.u32 %v170, 4294901760
        %209 = vmatpush1.msra.mxu0 %v208
        %210 = vmatprep.subr.mxu0 0.0
        %v211 = vand.u32 %v169, 4294901760
        %212 = vmatpush1.msra.mxu0 %v211
        %213 = vmatprep.subr.mxu0 0.0
        %v214 = vand.u32 %v168, 4294901760
        %215 = vmatpush1.msra.mxu0 %v214
        %216 = vmatprep.subr.mxu0 0.0
        %v217 = vand.u32 %v167, 4294901760
        %218 = vmatpush1.msra.mxu0 %v217
        %219 = vmatprep.subr.mxu0 0.0
        %220 = vmatpush2.msra.mxu0 0.0
        %221 = vmatprep.subr.mxu0 0.0
        %222 = vmatpush2.msra.mxu0 0.0
        %223 = vmatprep.subr.mxu0 0.0
        %224 = vmatpush2.msra.mxu0 0.0
        %225 = vmatprep.subr.mxu0 0.0
        %226 = vmatpush2.msra.mxu0 0.0
        %227 = vmatprep.subr.mxu0 0.0
        %228 = vmatpush2.msra.mxu0 0.0
        %229 = vmatprep.subr.mxu0 0.0
        %230 = vmatpush2.msra.mxu0 0.0
        %231 = vmatprep.subr.mxu0 0.0
        %232 = vmatpush2.msra.mxu0 0.0
        %233 = vmatprep.subr.mxu0 0.0
        %234 = vmatpush2.msra.mxu0 0.0
        %235 = vmatprep.subr.mxu0 0.0
        %236 = vmatpush2.msra.mxu0 0.0
        %237 = vmatprep.subr.mxu0 0.0
        %238 = vmatpush2.msra.mxu0 0.0
        %239 = vmatprep.subr.mxu0 0.0
        %240 = vmatpush2.msra.mxu0 0.0
        %241 = vmatprep.subr.mxu0 0.0
        %242 = vmatpush2.msra.mxu0 0.0
        %243 = vmatprep.subr.mxu0 0.0
        %244 = vmatpush2.msra.mxu0 0.0
        %245 = vmatprep.subr.mxu0 0.0
        %246 = vmatpush2.msra.mxu0 0.0
        %247 = vmatprep.subr.mxu0 0.0
        %248 = vmatpush2.msra.mxu0 0.0
        %249 = vmatprep.subr.mxu0 0.0
        %250 = vmatpush2.msra.mxu0 0.0
        %251 = vmatprep.mubr.f32.mxu0 0.0
        %v252 = vand.u32 %v177, 4294901760
        %v253 = vsub.f32 %v177, %v252
        %v254 = vand.u32 %v253, 4294901760
        %v255 = vsub.f32 %v253, %v254
        %v256 = vand.u32 %v255, 4294901760
        %257 = vmatmul.mubr.f32.gmra.mxu0 %v256
        %v258 = vpop.f32.mrf.mxu0
        %v259 = vadd.f32 0.0, %v258
        %v260 = vpop.f32.mrf.mxu0
        %261 = vdwg.mxu0
        %262 = vmatprep.subr.mxu0 0.0
        %263 = vmatpush1.msra.mxu0 0.0
        %264 = vmatprep.subr.mxu0 0.0
        %265 = vmatpush1.msra.mxu0 0.0
        %266 = vmatprep.subr.mxu0 0.0
        %267 = vmatpush1.msra.mxu0 0.0
        %268 = vmatprep.subr.mxu0 0.0
        %269 = vmatpush1.msra.mxu0 0.0
        %270 = vmatprep.subr.mxu0 0.0
        %271 = vmatpush1.msra.mxu0 0.0
        %272 = vmatprep.subr.mxu0 0.0
        %273 = vmatpush1.msra.mxu0 0.0
        %274 = vmatprep.subr.mxu0 0.0
        %275 = vmatpush1.msra.mxu0 0.0
        %276 = vmatprep.subr.mxu0 0.0
        %277 = vmatpush1.msra.mxu0 0.0
        %278 = vmatprep.subr.mxu0 0.0
        %v279 = vand.u32 %v174, 4294901760
        %v280 = vsub.f32 %v174, %v279
        %v281 = vand.u32 %v280, 4294901760
        %v282 = vsub.f32 %v280, %v281
        %v283 = vand.u32 %v282, 4294901760
        %284 = vmatpush1.msra.mxu0 %v283
        %285 = vmatprep.subr.mxu0 0.0
        %v286 = vand.u32 %v173, 4294901760
        %v287 = vsub.f32 %v173, %v286
        %v288 = vand.u32 %v287, 4294901760
        %v289 = vsub.f32 %v287, %v288
        %v290 = vand.u32 %v289, 4294901760
        %291 = vmatpush1.msra.mxu0 %v290
        %292 = vmatprep.subr.mxu0 0.0
        %v293 = vand.u32 %v172, 4294901760
        %v294 = vsub.f32 %v172, %v293
        %v295 = vand.u32 %v294, 4294901760
        %v296 = vsub.f32 %v294, %v295
        %v297 = vand.u32 %v296, 4294901760
        %298 = vmatpush1.msra.mxu0 %v297
        %299 = vmatprep.subr.mxu0 0.0
        %v300 = vand.u32 %v171, 4294901760
        %v301 = vsub.f32 %v171, %v300
        %v302 = vand.u32 %v301, 4294901760
        %v303 = vsub.f32 %v301, %v302
        %v304 = vand.u32 %v303, 4294901760
        %305 = vmatpush1.msra.mxu0 %v304
        %306 = vmatprep.subr.mxu0 0.0
        %v307 = vand.u32 %v170, 4294901760
        %v308 = vsub.f32 %v170, %v307
        %v309 = vand.u32 %v308, 4294901760
        %v310 = vsub.f32 %v308, %v309
        %v311 = vand.u32 %v310, 4294901760
        %312 = vmatpush1.msra.mxu0 %v311
        %313 = vmatprep.subr.mxu0 0.0
        %v314 = vand.u32 %v169, 4294901760
        %v315 = vsub.f32 %v169, %v314
        %v316 = vand.u32 %v315, 4294901760
        %v317 = vsub.f32 %v315, %v316
        %v318 = vand.u32 %v317, 4294901760
        %319 = vmatpush1.msra.mxu0 %v318
        %320 = vmatprep.subr.mxu0 0.0
        %v321 = vand.u32 %v168, 4294901760
        %v322 = vsub.f32 %v168, %v321
        %v323 = vand.u32 %v322, 4294901760
        %v324 = vsub.f32 %v322, %v323
        %v325 = vand.u32 %v324, 4294901760
        %326 = vmatpush1.msra.mxu0 %v325
        %327 = vmatprep.subr.mxu0 0.0
        %v328 = vand.u32 %v167, 4294901760
        %v329 = vsub.f32 %v167, %v328
        %v330 = vand.u32 %v329, 4294901760
        %v331 = vsub.f32 %v329, %v330
        %v332 = vand.u32 %v331, 4294901760
        %333 = vmatpush1.msra.mxu0 %v332
        %334 = vmatprep.subr.mxu0 0.0
        %335 = vmatpush2.msra.mxu0 0.0
        %336 = vmatprep.subr.mxu0 0.0
        %337 = vmatpush2.msra.mxu0 0.0
        %338 = vmatprep.subr.mxu0 0.0
        %339 = vmatpush2.msra.mxu0 0.0
        %340 = vmatprep.subr.mxu0 0.0
        %341 = vmatpush2.msra.mxu0 0.0
        %342 = vmatprep.subr.mxu0 0.0
        %343 = vmatpush2.msra.mxu0 0.0
        %344 = vmatprep.subr.mxu0 0.0
        %345 = vmatpush2.msra.mxu0 0.0
        %346 = vmatprep.subr.mxu0 0.0
        %347 = vmatpush2.msra.mxu0 0.0
        %348 = vmatprep.subr.mxu0 0.0
        %349 = vmatpush2.msra.mxu0 0.0
        %350 = vmatprep.subr.mxu0 0.0
        %351 = vmatpush2.msra.mxu0 0.0
        %352 = vmatprep.subr.mxu0 0.0
        %353 = vmatpush2.msra.mxu0 0.0
        %354 = vmatprep.subr.mxu0 0.0
        %355 = vmatpush2.msra.mxu0 0.0
        %356 = vmatprep.subr.mxu0 0.0
        %357 = vmatpush2.msra.mxu0 0.0
        %358 = vmatprep.subr.mxu0 0.0
        %359 = vmatpush2.msra.mxu0 0.0
        %360 = vmatprep.subr.mxu0 0.0
        %361 = vmatpush2.msra.mxu0 0.0
        %362 = vmatprep.subr.mxu0 0.0
        %363 = vmatpush2.msra.mxu0 0.0
        %364 = vmatprep.subr.mxu0 0.0
        %365 = vmatpush2.msra.mxu0 0.0
        %366 = vmatprep.mubr.f32.mxu0 0.0
        %v367 = vand.u32 %v177, 4294901760
        %368 = vmatmul.mubr.f32.gmra.mxu0 %v367
        %v369 = vpop.f32.mrf.mxu0
        %v370 = vadd.f32 %v259, %v369
        %v371 = vpop.f32.mrf.mxu0
        %372 = vdwg.mxu0
        %373 = vmatprep.subr.mxu0 0.0
        %374 = vmatpush1.msra.mxu0 0.0
        %375 = vmatprep.subr.mxu0 0.0
        %376 = vmatpush1.msra.mxu0 0.0
        %377 = vmatprep.subr.mxu0 0.0
        %378 = vmatpush1.msra.mxu0 0.0
        %379 = vmatprep.subr.mxu0 0.0
        %380 = vmatpush1.msra.mxu0 0.0
        %381 = vmatprep.subr.mxu0 0.0
        %382 = vmatpush1.msra.mxu0 0.0
        %383 = vmatprep.subr.mxu0 0.0
        %384 = vmatpush1.msra.mxu0 0.0
        %385 = vmatprep.subr.mxu0 0.0
        %386 = vmatpush1.msra.mxu0 0.0
        %387 = vmatprep.subr.mxu0 0.0
        %388 = vmatpush1.msra.mxu0 0.0
        %389 = vmatprep.subr.mxu0 0.0
        %v390 = vand.u32 %v174, 4294901760
        %v391 = vsub.f32 %v174, %v390
        %392 = vmatpush1.msra.mxu0 %v391
        %393 = vmatprep.subr.mxu0 0.0
        %v394 = vand.u32 %v173, 4294901760
        %v395 = vsub.f32 %v173, %v394
        %396 = vmatpush1.msra.mxu0 %v395
        %397 = vmatprep.subr.mxu0 0.0
        %v398 = vand.u32 %v172, 4294901760
        %v399 = vsub.f32 %v172, %v398
        %400 = vmatpush1.msra.mxu0 %v399
        %401 = vmatprep.subr.mxu0 0.0
        %v402 = vand.u32 %v171, 4294901760
        %v403 = vsub.f32 %v171, %v402
        %404 = vmatpush1.msra.mxu0 %v403
        %405 = vmatprep.subr.mxu0 0.0
        %v406 = vand.u32 %v170, 4294901760
        %v407 = vsub.f32 %v170, %v406
        %408 = vmatpush1.msra.mxu0 %v407
        %409 = vmatprep.subr.mxu0 0.0
        %v410 = vand.u32 %v169, 4294901760
        %v411 = vsub.f32 %v169, %v410
        %412 = vmatpush1.msra.mxu0 %v411
        %413 = vmatprep.subr.mxu0 0.0
        %v414 = vand.u32 %v168, 4294901760
        %v415 = vsub.f32 %v168, %v414
        %416 = vmatpush1.msra.mxu0 %v415
        %417 = vmatprep.subr.mxu0 0.0
        %v418 = vand.u32 %v167, 4294901760
        %v419 = vsub.f32 %v167, %v418
        %420 = vmatpush1.msra.mxu0 %v419
        %421 = vmatprep.subr.mxu0 0.0
        %422 = vmatpush2.msra.mxu0 0.0
        %423 = vmatprep.subr.mxu0 0.0
        %424 = vmatpush2.msra.mxu0 0.0
        %425 = vmatprep.subr.mxu0 0.0
        %426 = vmatpush2.msra.mxu0 0.0
        %427 = vmatprep.subr.mxu0 0.0
        %428 = vmatpush2.msra.mxu0 0.0
        %429 = vmatprep.subr.mxu0 0.0
        %430 = vmatpush2.msra.mxu0 0.0
        %431 = vmatprep.subr.mxu0 0.0
        %432 = vmatpush2.msra.mxu0 0.0
        %433 = vmatprep.subr.mxu0 0.0
        %434 = vmatpush2.msra.mxu0 0.0
        %435 = vmatprep.subr.mxu0 0.0
        %436 = vmatpush2.msra.mxu0 0.0
        %437 = vmatprep.subr.mxu0 0.0
        %438 = vmatpush2.msra.mxu0 0.0
        %439 = vmatprep.subr.mxu0 0.0
        %440 = vmatpush2.msra.mxu0 0.0
        %441 = vmatprep.subr.mxu0 0.0
        %442 = vmatpush2.msra.mxu0 0.0
        %443 = vmatprep.subr.mxu0 0.0
        %444 = vmatpush2.msra.mxu0 0.0
        %445 = vmatprep.subr.mxu0 0.0
        %446 = vmatpush2.msra.mxu0 0.0
        %447 = vmatprep.subr.mxu0 0.0
        %448 = vmatpush2.msra.mxu0 0.0
        %449 = vmatprep.subr.mxu0 0.0
        %450 = vmatpush2.msra.mxu0 0.0
        %451 = vmatprep.subr.mxu0 0.0
        %452 = vmatpush2.msra.mxu0 0.0
        %453 = vmatprep.mubr.f32.mxu0 0.0
        %v454 = vand.u32 %v177, 4294901760
        %v455 = vsub.f32 %v177, %v454
        %456 = vmatmul.mubr.f32.gmra.mxu0 %v455
        %v457 = vpop.f32.mrf.mxu0
        %v458 = vadd.f32 %v370, %v457
        %v459 = vpop.f32.mrf.mxu0
        %460 = vdwg.mxu0
        %461 = vmatprep.subr.mxu0 0.0
        %462 = vmatpush1.msra.mxu0 0.0
        %463 = vmatprep.subr.mxu0 0.0
        %464 = vmatpush1.msra.mxu0 0.0
        %465 = vmatprep.subr.mxu0 0.0
        %466 = vmatpush1.msra.mxu0 0.0
        %467 = vmatprep.subr.mxu0 0.0
        %468 = vmatpush1.msra.mxu0 0.0
        %469 = vmatprep.subr.mxu0 0.0
        %470 = vmatpush1.msra.mxu0 0.0
        %471 = vmatprep.subr.mxu0 0.0
        %472 = vmatpush1.msra.mxu0 0.0
        %473 = vmatprep.subr.mxu0 0.0
        %474 = vmatpush1.msra.mxu0 0.0
        %475 = vmatprep.subr.mxu0 0.0
        %476 = vmatpush1.msra.mxu0 0.0
        %477 = vmatprep.subr.mxu0 0.0
        %v478 = vand.u32 %v174, 4294901760
        %479 = vmatpush1.msra.mxu0 %v478
        %480 = vmatprep.subr.mxu0 0.0
        %v481 = vand.u32 %v173, 4294901760
        %482 = vmatpush1.msra.mxu0 %v481
        %483 = vmatprep.subr.mxu0 0.0
        %v484 = vand.u32 %v172, 4294901760
        %485 = vmatpush1.msra.mxu0 %v484
        %486 = vmatprep.subr.mxu0 0.0
        %v487 = vand.u32 %v171, 4294901760
        %488 = vmatpush1.msra.mxu0 %v487
        %489 = vmatprep.subr.mxu0 0.0
        %v490 = vand.u32 %v170, 4294901760
        %491 = vmatpush1.msra.mxu0 %v490
        %492 = vmatprep.subr.mxu0 0.0
        %v493 = vand.u32 %v169, 4294901760
        %494 = vmatpush1.msra.mxu0 %v493
        %495 = vmatprep.subr.mxu0 0.0
        %v496 = vand.u32 %v168, 4294901760
        %497 = vmatpush1.msra.mxu0 %v496
        %498 = vmatprep.subr.mxu0 0.0
        %v499 = vand.u32 %v167, 4294901760
        %500 = vmatpush1.msra.mxu0 %v499
        %501 = vmatprep.subr.mxu0 0.0
        %502 = vmatpush2.msra.mxu0 0.0
        %503 = vmatprep.subr.mxu0 0.0
        %504 = vmatpush2.msra.mxu0 0.0
        %505 = vmatprep.subr.mxu0 0.0
        %506 = vmatpush2.msra.mxu0 0.0
        %507 = vmatprep.subr.mxu0 0.0
        %508 = vmatpush2.msra.mxu0 0.0
        %509 = vmatprep.subr.mxu0 0.0
        %510 = vmatpush2.msra.mxu0 0.0
        %511 = vmatprep.subr.mxu0 0.0
        %512 = vmatpush2.msra.mxu0 0.0
        %513 = vmatprep.subr.mxu0 0.0
        %514 = vmatpush2.msra.mxu0 0.0
        %515 = vmatprep.subr.mxu0 0.0
        %516 = vmatpush2.msra.mxu0 0.0
        %517 = vmatprep.subr.mxu0 0.0
        %518 = vmatpush2.msra.mxu0 0.0
        %519 = vmatprep.subr.mxu0 0.0
        %520 = vmatpush2.msra.mxu0 0.0
        %521 = vmatprep.subr.mxu0 0.0
        %522 = vmatpush2.msra.mxu0 0.0
        %523 = vmatprep.subr.mxu0 0.0
        %524 = vmatpush2.msra.mxu0 0.0
        %525 = vmatprep.subr.mxu0 0.0
        %526 = vmatpush2.msra.mxu0 0.0
        %527 = vmatprep.subr.mxu0 0.0
        %528 = vmatpush2.msra.mxu0 0.0
        %529 = vmatprep.subr.mxu0 0.0
        %530 = vmatpush2.msra.mxu0 0.0
        %531 = vmatprep.subr.mxu0 0.0
        %532 = vmatpush2.msra.mxu0 0.0
        %533 = vmatprep.mubr.f32.mxu0 0.0
        %v534 = vand.u32 %v177, 4294901760
        %v535 = vsub.f32 %v177, %v534
        %v536 = vand.u32 %v535, 4294901760
        %537 = vmatmul.mubr.f32.gmra.mxu0 %v536
        %v538 = vpop.f32.mrf.mxu0
        %v539 = vadd.f32 %v458, %v538
        %v540 = vpop.f32.mrf.mxu0
        %541 = vdwg.mxu0
        %542 = vmatprep.subr.mxu0 0.0
        %543 = vmatpush1.msra.mxu0 0.0
        %544 = vmatprep.subr.mxu0 0.0
        %545 = vmatpush1.msra.mxu0 0.0
        %546 = vmatprep.subr.mxu0 0.0
        %547 = vmatpush1.msra.mxu0 0.0
        %548 = vmatprep.subr.mxu0 0.0
        %549 = vmatpush1.msra.mxu0 0.0
        %550 = vmatprep.subr.mxu0 0.0
        %551 = vmatpush1.msra.mxu0 0.0
        %552 = vmatprep.subr.mxu0 0.0
        %553 = vmatpush1.msra.mxu0 0.0
        %554 = vmatprep.subr.mxu0 0.0
        %555 = vmatpush1.msra.mxu0 0.0
        %556 = vmatprep.subr.mxu0 0.0
        %557 = vmatpush1.msra.mxu0 0.0
        %558 = vmatprep.subr.mxu0 0.0
        %v559 = vand.u32 %v174, 4294901760
        %v560 = vsub.f32 %v174, %v559
        %v561 = vand.u32 %v560, 4294901760
        %562 = vmatpush1.msra.mxu0 %v561
        %563 = vmatprep.subr.mxu0 0.0
        %v564 = vand.u32 %v173, 4294901760
        %v565 = vsub.f32 %v173, %v564
        %v566 = vand.u32 %v565, 4294901760
        %567 = vmatpush1.msra.mxu0 %v566
        %568 = vmatprep.subr.mxu0 0.0
        %v569 = vand.u32 %v172, 4294901760
        %v570 = vsub.f32 %v172, %v569
        %v571 = vand.u32 %v570, 4294901760
        %572 = vmatpush1.msra.mxu0 %v571
        %573 = vmatprep.subr.mxu0 0.0
        %v574 = vand.u32 %v171, 4294901760
        %v575 = vsub.f32 %v171, %v574
        %v576 = vand.u32 %v575, 4294901760
        %577 = vmatpush1.msra.mxu0 %v576
        %578 = vmatprep.subr.mxu0 0.0
        %v579 = vand.u32 %v170, 4294901760
        %v580 = vsub.f32 %v170, %v579
        %v581 = vand.u32 %v580, 4294901760
        %582 = vmatpush1.msra.mxu0 %v581
        %583 = vmatprep.subr.mxu0 0.0
        %v584 = vand.u32 %v169, 4294901760
        %v585 = vsub.f32 %v169, %v584
        %v586 = vand.u32 %v585, 4294901760
        %587 = vmatpush1.msra.mxu0 %v586
        %588 = vmatprep.subr.mxu0 0.0
        %v589 = vand.u32 %v168, 4294901760
        %v590 = vsub.f32 %v168, %v589
        %v591 = vand.u32 %v590, 4294901760
        %592 = vmatpush1.msra.mxu0 %v591
        %593 = vmatprep.subr.mxu0 0.0
        %v594 = vand.u32 %v167, 4294901760
        %v595 = vsub.f32 %v167, %v594
        %v596 = vand.u32 %v595, 4294901760
        %597 = vmatpush1.msra.mxu0 %v596
        %598 = vmatprep.subr.mxu0 0.0
        %599 = vmatpush2.msra.mxu0 0.0
        %600 = vmatprep.subr.mxu0 0.0
        %601 = vmatpush2.msra.mxu0 0.0
        %602 = vmatprep.subr.mxu0 0.0
        %603 = vmatpush2.msra.mxu0 0.0
        %604 = vmatprep.subr.mxu0 0.0
        %605 = vmatpush2.msra.mxu0 0.0
        %606 = vmatprep.subr.mxu0 0.0
        %607 = vmatpush2.msra.mxu0 0.0
        %608 = vmatprep.subr.mxu0 0.0
        %609 = vmatpush2.msra.mxu0 0.0
        %610 = vmatprep.subr.mxu0 0.0
        %611 = vmatpush2.msra.mxu0 0.0
        %612 = vmatprep.subr.mxu0 0.0
        %613 = vmatpush2.msra.mxu0 0.0
        %614 = vmatprep.subr.mxu0 0.0
        %615 = vmatpush2.msra.mxu0 0.0
        %616 = vmatprep.subr.mxu0 0.0
        %617 = vmatpush2.msra.mxu0 0.0
        %618 = vmatprep.subr.mxu0 0.0
        %619 = vmatpush2.msra.mxu0 0.0
        %620 = vmatprep.subr.mxu0 0.0
        %621 = vmatpush2.msra.mxu0 0.0
        %622 = vmatprep.subr.mxu0 0.0
        %623 = vmatpush2.msra.mxu0 0.0
        %624 = vmatprep.subr.mxu0 0.0
        %625 = vmatpush2.msra.mxu0 0.0
        %626 = vmatprep.subr.mxu0 0.0
        %627 = vmatpush2.msra.mxu0 0.0
        %628 = vmatprep.subr.mxu0 0.0
        %629 = vmatpush2.msra.mxu0 0.0
        %630 = vmatprep.mubr.f32.mxu0 0.0
        %v631 = vand.u32 %v177, 4294901760
        %632 = vmatmul.mubr.f32.gmra.mxu0 %v631
        %v633 = vpop.f32.mrf.mxu0
        %v634 = vadd.f32 %v539, %v633
        %v635 = vpop.f32.mrf.mxu0
        %636 = vdwg.mxu0
        %637 = vmatprep.subr.mxu0 0.0
        %638 = vmatpush1.msra.mxu0 0.0
        %639 = vmatprep.subr.mxu0 0.0
        %640 = vmatpush1.msra.mxu0 0.0
        %641 = vmatprep.subr.mxu0 0.0
        %642 = vmatpush1.msra.mxu0 0.0
        %643 = vmatprep.subr.mxu0 0.0
        %644 = vmatpush1.msra.mxu0 0.0
        %645 = vmatprep.subr.mxu0 0.0
        %646 = vmatpush1.msra.mxu0 0.0
        %647 = vmatprep.subr.mxu0 0.0
        %648 = vmatpush1.msra.mxu0 0.0
        %649 = vmatprep.subr.mxu0 0.0
        %650 = vmatpush1.msra.mxu0 0.0
        %651 = vmatprep.subr.mxu0 0.0
        %652 = vmatpush1.msra.mxu0 0.0
        %653 = vmatprep.subr.mxu0 0.0
        %v654 = vand.u32 %v174, 4294901760
        %655 = vmatpush1.msra.mxu0 %v654
        %656 = vmatprep.subr.mxu0 0.0
        %v657 = vand.u32 %v173, 4294901760
        %658 = vmatpush1.msra.mxu0 %v657
        %659 = vmatprep.subr.mxu0 0.0
        %v660 = vand.u32 %v172, 4294901760
        %661 = vmatpush1.msra.mxu0 %v660
        %662 = vmatprep.subr.mxu0 0.0
        %v663 = vand.u32 %v171, 4294901760
        %664 = vmatpush1.msra.mxu0 %v663
        %665 = vmatprep.subr.mxu0 0.0
        %v666 = vand.u32 %v170, 4294901760
        %667 = vmatpush1.msra.mxu0 %v666
        %668 = vmatprep.subr.mxu0 0.0
        %v669 = vand.u32 %v169, 4294901760
        %670 = vmatpush1.msra.mxu0 %v669
        %671 = vmatprep.subr.mxu0 0.0
        %v672 = vand.u32 %v168, 4294901760
        %673 = vmatpush1.msra.mxu0 %v672
        %674 = vmatprep.subr.mxu0 0.0
        %v675 = vand.u32 %v167, 4294901760
        %676 = vmatpush1.msra.mxu0 %v675
        %677 = vmatprep.subr.mxu0 0.0
        %678 = vmatpush2.msra.mxu0 0.0
        %679 = vmatprep.subr.mxu0 0.0
        %680 = vmatpush2.msra.mxu0 0.0
        %681 = vmatprep.subr.mxu0 0.0
        %682 = vmatpush2.msra.mxu0 0.0
        %683 = vmatprep.subr.mxu0 0.0
        %684 = vmatpush2.msra.mxu0 0.0
        %685 = vmatprep.subr.mxu0 0.0
        %686 = vmatpush2.msra.mxu0 0.0
        %687 = vmatprep.subr.mxu0 0.0
        %688 = vmatpush2.msra.mxu0 0.0
        %689 = vmatprep.subr.mxu0 0.0
        %690 = vmatpush2.msra.mxu0 0.0
        %691 = vmatprep.subr.mxu0 0.0
        %692 = vmatpush2.msra.mxu0 0.0
        %693 = vmatprep.subr.mxu0 0.0
        %694 = vmatpush2.msra.mxu0 0.0
        %695 = vmatprep.subr.mxu0 0.0
        %696 = vmatpush2.msra.mxu0 0.0
        %697 = vmatprep.subr.mxu0 0.0
        %698 = vmatpush2.msra.mxu0 0.0
        %699 = vmatprep.subr.mxu0 0.0
        %700 = vmatpush2.msra.mxu0 0.0
        %701 = vmatprep.subr.mxu0 0.0
        %702 = vmatpush2.msra.mxu0 0.0
        %703 = vmatprep.subr.mxu0 0.0
        %704 = vmatpush2.msra.mxu0 0.0
        %705 = vmatprep.subr.mxu0 0.0
        %706 = vmatpush2.msra.mxu0 0.0
        %707 = vmatprep.subr.mxu0 0.0
        %708 = vmatpush2.msra.mxu0 0.0
        %709 = vmatprep.mubr.f32.mxu0 0.0
        %v710 = vand.u32 %v177, 4294901760
        %711 = vmatmul.mubr.f32.gmra.mxu0 %v710
        %v712 = vpop.f32.mrf.mxu0
        %v713 = vadd.f32 %v634, %v712
        %v714 = vpop.f32.mrf.mxu0
        %715 = vdwg.mxu0
        %v716 = vmax.f32 %v713, 0.0
        %v717 = vld [vmem:[%s2] sm:$0xff]
        %v718 = vld [vmem:[%s2 + $0x8] sm:$0xff]
        %v719 = vld [vmem:[%s2 + $0x10] sm:$0xff]
        %v720 = vld [vmem:[%s2 + $0x18] sm:$0xff]
        %v721 = vld [vmem:[%s2 + $0x20] sm:$0xff]
        %v722 = vld [vmem:[%s2 + $0x28] sm:$0xff]
        %v723 = vld [vmem:[%s2 + $0x30] sm:$0xff]
        %v724 = vld [vmem:[%s2 + $0x38] sm:$0xff]
        %v725 = vld [vmem:[%s2 + $0x40] sm:$0xff]
        %v726 = vld [vmem:[%s2 + $0x48] sm:$0xff]
        %v727 = vld [vmem:[%s2 + $0x50] sm:$0xff]
        %v728 = vld [vmem:[%s2 + $0x58] sm:$0xff]
        %v729 = vld [vmem:[%s2 + $0x60] sm:$0xff]
        %v730 = vld [vmem:[%s2 + $0x68] sm:$0xff]
        %v731 = vld [vmem:[%s2 + $0x70] sm:$0xff]
        %v732 = vld [vmem:[%s2 + $0x78] sm:$0xff]
        %733 = vmatprep.subr.mxu0 0.0
        %v734 = vand.u32 %v732, 4294901760
        %735 = vmatpush1.msra.mxu0 %v734
        %736 = vmatprep.subr.mxu0 0.0
        %v737 = vand.u32 %v731, 4294901760
        %738 = vmatpush1.msra.mxu0 %v737
        %739 = vmatprep.subr.mxu0 0.0
        %v740 = vand.u32 %v730, 4294901760
        %741 = vmatpush1.msra.mxu0 %v740
        %742 = vmatprep.subr.mxu0 0.0
        %v743 = vand.u32 %v729, 4294901760
        %744 = vmatpush1.msra.mxu0 %v743
        %745 = vmatprep.subr.mxu0 0.0
        %v746 = vand.u32 %v728, 4294901760
        %747 = vmatpush1.msra.mxu0 %v746
        %748 = vmatprep.subr.mxu0 0.0
        %v749 = vand.u32 %v727, 4294901760
        %750 = vmatpush1.msra.mxu0 %v749
        %751 = vmatprep.subr.mxu0 0.0
        %v752 = vand.u32 %v726, 4294901760
        %753 = vmatpush1.msra.mxu0 %v752
        %754 = vmatprep.subr.mxu0 0.0
        %v755 = vand.u32 %v725, 4294901760
        %756 = vmatpush1.msra.mxu0 %v755
        %757 = vmatprep.subr.mxu0 0.0
        %v758 = vand.u32 %v724, 4294901760
        %759 = vmatpush1.msra.mxu0 %v758
        %760 = vmatprep.subr.mxu0 0.0
        %v761 = vand.u32 %v723, 4294901760
        %762 = vmatpush1.msra.mxu0 %v761
        %763 = vmatprep.subr.mxu0 0.0
        %v764 = vand.u32 %v722, 4294901760
        %765 = vmatpush1.msra.mxu0 %v764
        %766 = vmatprep.subr.mxu0 0.0
        %v767 = vand.u32 %v721, 4294901760
        %768 = vmatpush1.msra.mxu0 %v767
        %769 = vmatprep.subr.mxu0 0.0
        %v770 = vand.u32 %v720, 4294901760
        %771 = vmatpush1.msra.mxu0 %v770
        %772 = vmatprep.subr.mxu0 0.0
        %v773 = vand.u32 %v719, 4294901760
        %774 = vmatpush1.msra.mxu0 %v773
        %775 = vmatprep.subr.mxu0 0.0
        %v776 = vand.u32 %v718, 4294901760
        %777 = vmatpush1.msra.mxu0 %v776
        %778 = vmatprep.subr.mxu0 0.0
        %v779 = vand.u32 %v717, 4294901760
        %780 = vmatpush1.msra.mxu0 %v779
        %781 = vmatprep.subr.mxu0 0.0
        %782 = vmatpush2.msra.mxu0 0.0
        %783 = vmatprep.subr.mxu0 0.0
        %784 = vmatpush2.msra.mxu0 0.0
        %785 = vmatprep.subr.mxu0 0.0
        %786 = vmatpush2.msra.mxu0 0.0
        %787 = vmatprep.subr.mxu0 0.0
        %788 = vmatpush2.msra.mxu0 0.0
        %789 = vmatprep.subr.mxu0 0.0
        %790 = vmatpush2.msra.mxu0 0.0
        %791 = vmatprep.subr.mxu0 0.0
        %792 = vmatpush2.msra.mxu0 0.0
        %793 = vmatprep.subr.mxu0 0.0
        %794 = vmatpush2.msra.mxu0 0.0
        %795 = vmatprep.subr.mxu0 0.0
        %796 = vmatpush2.msra.mxu0 0.0
        %797 = vmatprep.subr.mxu0 0.0
        %798 = vmatpush2.msra.mxu0 0.0
        %799 = vmatprep.subr.mxu0 0.0
        %800 = vmatpush2.msra.mxu0 0.0
        %801 = vmatprep.subr.mxu0 0.0
        %802 = vmatpush2.msra.mxu0 0.0
        %803 = vmatprep.subr.mxu0 0.0
        %804 = vmatpush2.msra.mxu0 0.0
        %805 = vmatprep.subr.mxu0 0.0
        %806 = vmatpush2.msra.mxu0 0.0
        %807 = vmatprep.subr.mxu0 0.0
        %808 = vmatpush2.msra.mxu0 0.0
        %809 = vmatprep.subr.mxu0 0.0
        %810 = vmatpush2.msra.mxu0 0.0
        %811 = vmatprep.subr.mxu0 0.0
        %812 = vmatpush2.msra.mxu0 0.0
        %813 = vmatprep.mubr.f32.mxu0 0.0
        %v814 = vand.u32 %v716, 4294901760
        %v815 = vsub.f32 %v716, %v814
        %v816 = vand.u32 %v815, 4294901760
        %v817 = vsub.f32 %v815, %v816
        %v818 = vand.u32 %v817, 4294901760
        %819 = vmatmul.mubr.f32.gmra.mxu0 %v818
        %v820 = vpop.f32.mrf.mxu0
        %v821 = vadd.f32 0.0, %v820
        %v822 = vpop.f32.mrf.mxu0
        %823 = vdwg.mxu0
        %824 = vmatprep.subr.mxu0 0.0
        %v825 = vand.u32 %v732, 4294901760
        %v826 = vsub.f32 %v732, %v825
        %v827 = vand.u32 %v826, 4294901760
        %v828 = vsub.f32 %v826, %v827
        %v829 = vand.u32 %v828, 4294901760
        %830 = vmatpush1.msra.mxu0 %v829
        %831 = vmatprep.subr.mxu0 0.0
        %v832 = vand.u32 %v731, 4294901760
        %v833 = vsub.f32 %v731, %v832
        %v834 = vand.u32 %v833, 4294901760
        %v835 = vsub.f32 %v833, %v834
        %v836 = vand.u32 %v835, 4294901760
        %837 = vmatpush1.msra.mxu0 %v836
        %838 = vmatprep.subr.mxu0 0.0
        %v839 = vand.u32 %v730, 4294901760
        %v840 = vsub.f32 %v730, %v839
        %v841 = vand.u32 %v840, 4294901760
        %v842 = vsub.f32 %v840, %v841
        %v843 = vand.u32 %v842, 4294901760
        %844 = vmatpush1.msra.mxu0 %v843
        %845 = vmatprep.subr.mxu0 0.0
        %v846 = vand.u32 %v729, 4294901760
        %v847 = vsub.f32 %v729, %v846
        %v848 = vand.u32 %v847, 4294901760
        %v849 = vsub.f32 %v847, %v848
        %v850 = vand.u32 %v849, 4294901760
        %851 = vmatpush1.msra.mxu0 %v850
        %852 = vmatprep.subr.mxu0 0.0
        %v853 = vand.u32 %v728, 4294901760
        %v854 = vsub.f32 %v728, %v853
        %v855 = vand.u32 %v854, 4294901760
        %v856 = vsub.f32 %v854, %v855
        %v857 = vand.u32 %v856, 4294901760
        %858 = vmatpush1.msra.mxu0 %v857
        %859 = vmatprep.subr.mxu0 0.0
        %v860 = vand.u32 %v727, 4294901760
        %v861 = vsub.f32 %v727, %v860
        %v862 = vand.u32 %v861, 4294901760
        %v863 = vsub.f32 %v861, %v862
        %v864 = vand.u32 %v863, 4294901760
        %865 = vmatpush1.msra.mxu0 %v864
        %866 = vmatprep.subr.mxu0 0.0
        %v867 = vand.u32 %v726, 4294901760
        %v868 = vsub.f32 %v726, %v867
        %v869 = vand.u32 %v868, 4294901760
        %v870 = vsub.f32 %v868, %v869
        %v871 = vand.u32 %v870, 4294901760
        %872 = vmatpush1.msra.mxu0 %v871
        %873 = vmatprep.subr.mxu0 0.0
        %v874 = vand.u32 %v725, 4294901760
        %v875 = vsub.f32 %v725, %v874
        %v876 = vand.u32 %v875, 4294901760
        %v877 = vsub.f32 %v875, %v876
        %v878 = vand.u32 %v877, 4294901760
        %879 = vmatpush1.msra.mxu0 %v878
        %880 = vmatprep.subr.mxu0 0.0
        %v881 = vand.u32 %v724, 4294901760
        %v882 = vsub.f32 %v724, %v881
        %v883 = vand.u32 %v882, 4294901760
        %v884 = vsub.f32 %v882, %v883
        %v885 = vand.u32 %v884, 4294901760
        %886 = vmatpush1.msra.mxu0 %v885
        %887 = vmatprep.subr.mxu0 0.0
        %v888 = vand.u32 %v723, 4294901760
        %v889 = vsub.f32 %v723, %v888
        %v890 = vand.u32 %v889, 4294901760
        %v891 = vsub.f32 %v889, %v890
        %v892 = vand.u32 %v891, 4294901760
        %893 = vmatpush1.msra.mxu0 %v892
        %894 = vmatprep.subr.mxu0 0.0
        %v895 = vand.u32 %v722, 4294901760
        %v896 = vsub.f32 %v722, %v895
        %v897 = vand.u32 %v896, 4294901760
        %v898 = vsub.f32 %v896, %v897
        %v899 = vand.u32 %v898, 4294901760
        %900 = vmatpush1.msra.mxu0 %v899
        %901 = vmatprep.subr.mxu0 0.0
        %v902 = vand.u32 %v721, 4294901760
        %v903 = vsub.f32 %v721, %v902
        %v904 = vand.u32 %v903, 4294901760
        %v905 = vsub.f32 %v903, %v904
        %v906 = vand.u32 %v905, 4294901760
        %907 = vmatpush1.msra.mxu0 %v906
        %908 = vmatprep.subr.mxu0 0.0
        %v909 = vand.u32 %v720, 4294901760
        %v910 = vsub.f32 %v720, %v909
        %v911 = vand.u32 %v910, 4294901760
        %v912 = vsub.f32 %v910, %v911
        %v913 = vand.u32 %v912, 4294901760
        %914 = vmatpush1.msra.mxu0 %v913
        %915 = vmatprep.subr.mxu0 0.0
        %v916 = vand.u32 %v719, 4294901760
        %v917 = vsub.f32 %v719, %v916
        %v918 = vand.u32 %v917, 4294901760
        %v919 = vsub.f32 %v917, %v918
        %v920 = vand.u32 %v919, 4294901760
        %921 = vmatpush1.msra.mxu0 %v920
        %922 = vmatprep.subr.mxu0 0.0
        %v923 = vand.u32 %v718, 4294901760
        %v924 = vsub.f32 %v718, %v923
        %v925 = vand.u32 %v924, 4294901760
        %v926 = vsub.f32 %v924, %v925
        %v927 = vand.u32 %v926, 4294901760
        %928 = vmatpush1.msra.mxu0 %v927
        %929 = vmatprep.subr.mxu0 0.0
        %v930 = vand.u32 %v717, 4294901760
        %v931 = vsub.f32 %v717, %v930
        %v932 = vand.u32 %v931, 4294901760
        %v933 = vsub.f32 %v931, %v932
        %v934 = vand.u32 %v933, 4294901760
        %935 = vmatpush1.msra.mxu0 %v934
        %936 = vmatprep.subr.mxu0 0.0
        %937 = vmatpush2.msra.mxu0 0.0
        %938 = vmatprep.subr.mxu0 0.0
        %939 = vmatpush2.msra.mxu0 0.0
        %940 = vmatprep.subr.mxu0 0.0
        %941 = vmatpush2.msra.mxu0 0.0
        %942 = vmatprep.subr.mxu0 0.0
        %943 = vmatpush2.msra.mxu0 0.0
        %944 = vmatprep.subr.mxu0 0.0
        %945 = vmatpush2.msra.mxu0 0.0
        %946 = vmatprep.subr.mxu0 0.0
        %947 = vmatpush2.msra.mxu0 0.0
        %948 = vmatprep.subr.mxu0 0.0
        %949 = vmatpush2.msra.mxu0 0.0
        %950 = vmatprep.subr.mxu0 0.0
        %951 = vmatpush2.msra.mxu0 0.0
        %952 = vmatprep.subr.mxu0 0.0
        %953 = vmatpush2.msra.mxu0 0.0
        %954 = vmatprep.subr.mxu0 0.0
        %955 = vmatpush2.msra.mxu0 0.0
        %956 = vmatprep.subr.mxu0 0.0
        %957 = vmatpush2.msra.mxu0 0.0
        %958 = vmatprep.subr.mxu0 0.0
        %959 = vmatpush2.msra.mxu0 0.0
        %960 = vmatprep.subr.mxu0 0.0
        %961 = vmatpush2.msra.mxu0 0.0
        %962 = vmatprep.subr.mxu0 0.0
        %963 = vmatpush2.msra.mxu0 0.0
        %964 = vmatprep.subr.mxu0 0.0
        %965 = vmatpush2.msra.mxu0 0.0
        %966 = vmatprep.subr.mxu0 0.0
        %967 = vmatpush2.msra.mxu0 0.0
        %968 = vmatprep.mubr.f32.mxu0 0.0
        %v969 = vand.u32 %v716, 4294901760
        %970 = vmatmul.mubr.f32.gmra.mxu0 %v969
        %v971 = vpop.f32.mrf.mxu0
        %v972 = vadd.f32 %v821, %v971
        %v973 = vpop.f32.mrf.mxu0
        %974 = vdwg.mxu0
        %975 = vmatprep.subr.mxu0 0.0
        %v976 = vand.u32 %v732, 4294901760
        %v977 = vsub.f32 %v732, %v976
        %978 = vmatpush1.msra.mxu0 %v977
        %979 = vmatprep.subr.mxu0 0.0
        %v980 = vand.u32 %v731, 4294901760
        %v981 = vsub.f32 %v731, %v980
        %982 = vmatpush1.msra.mxu0 %v981
        %983 = vmatprep.subr.mxu0 0.0
        %v984 = vand.u32 %v730, 4294901760
        %v985 = vsub.f32 %v730, %v984
        %986 = vmatpush1.msra.mxu0 %v985
        %987 = vmatprep.subr.mxu0 0.0
        %v988 = vand.u32 %v729, 4294901760
        %v989 = vsub.f32 %v729, %v988
        %990 = vmatpush1.msra.mxu0 %v989
        %991 = vmatprep.subr.mxu0 0.0
        %v992 = vand.u32 %v728, 4294901760
        %v993 = vsub.f32 %v728, %v992
        %994 = vmatpush1.msra.mxu0 %v993
        %995 = vmatprep.subr.mxu0 0.0
        %v996 = vand.u32 %v727, 4294901760
        %v997 = vsub.f32 %v727, %v996
        %998 = vmatpush1.msra.mxu0 %v997
        %999 = vmatprep.subr.mxu0 0.0
        %v1000 = vand.u32 %v726, 4294901760
        %v1001 = vsub.f32 %v726, %v1000
        %1002 = vmatpush1.msra.mxu0 %v1001
        %1003 = vmatprep.subr.mxu0 0.0
        %v1004 = vand.u32 %v725, 4294901760
        %v1005 = vsub.f32 %v725, %v1004
        %1006 = vmatpush1.msra.mxu0 %v1005
        %1007 = vmatprep.subr.mxu0 0.0
        %v1008 = vand.u32 %v724, 4294901760
        %v1009 = vsub.f32 %v724, %v1008
        %1010 = vmatpush1.msra.mxu0 %v1009
        %1011 = vmatprep.subr.mxu0 0.0
        %v1012 = vand.u32 %v723, 4294901760
        %v1013 = vsub.f32 %v723, %v1012
        %1014 = vmatpush1.msra.mxu0 %v1013
        %1015 = vmatprep.subr.mxu0 0.0
        %v1016 = vand.u32 %v722, 4294901760
        %v1017 = vsub.f32 %v722, %v1016
        %1018 = vmatpush1.msra.mxu0 %v1017
        %1019 = vmatprep.subr.mxu0 0.0
        %v1020 = vand.u32 %v721, 4294901760
        %v1021 = vsub.f32 %v721, %v1020
        %1022 = vmatpush1.msra.mxu0 %v1021
        %1023 = vmatprep.subr.mxu0 0.0
        %v1024 = vand.u32 %v720, 4294901760
        %v1025 = vsub.f32 %v720, %v1024
        %1026 = vmatpush1.msra.mxu0 %v1025
        %1027 = vmatprep.subr.mxu0 0.0
        %v1028 = vand.u32 %v719, 4294901760
        %v1029 = vsub.f32 %v719, %v1028
        %1030 = vmatpush1.msra.mxu0 %v1029
        %1031 = vmatprep.subr.mxu0 0.0
        %v1032 = vand.u32 %v718, 4294901760
        %v1033 = vsub.f32 %v718, %v1032
        %1034 = vmatpush1.msra.mxu0 %v1033
        %1035 = vmatprep.subr.mxu0 0.0
        %v1036 = vand.u32 %v717, 4294901760
        %v1037 = vsub.f32 %v717, %v1036
        %1038 = vmatpush1.msra.mxu0 %v1037
        %1039 = vmatprep.subr.mxu0 0.0
        %1040 = vmatpush2.msra.mxu0 0.0
        %1041 = vmatprep.subr.mxu0 0.0
        %1042 = vmatpush2.msra.mxu0 0.0
        %1043 = vmatprep.subr.mxu0 0.0
        %1044 = vmatpush2.msra.mxu0 0.0
        %1045 = vmatprep.subr.mxu0 0.0
        %1046 = vmatpush2.msra.mxu0 0.0
        %1047 = vmatprep.subr.mxu0 0.0
        %1048 = vmatpush2.msra.mxu0 0.0
        %1049 = vmatprep.subr.mxu0 0.0
        %1050 = vmatpush2.msra.mxu0 0.0
        %1051 = vmatprep.subr.mxu0 0.0
        %1052 = vmatpush2.msra.mxu0 0.0
        %1053 = vmatprep.subr.mxu0 0.0
        %1054 = vmatpush2.msra.mxu0 0.0
        %1055 = vmatprep.subr.mxu0 0.0
        %1056 = vmatpush2.msra.mxu0 0.0
        %1057 = vmatprep.subr.mxu0 0.0
        %1058 = vmatpush2.msra.mxu0 0.0
        %1059 = vmatprep.subr.mxu0 0.0
        %1060 = vmatpush2.msra.mxu0 0.0
        %1061 = vmatprep.subr.mxu0 0.0
        %1062 = vmatpush2.msra.mxu0 0.0
        %1063 = vmatprep.subr.mxu0 0.0
        %1064 = vmatpush2.msra.mxu0 0.0
        %1065 = vmatprep.subr.mxu0 0.0
        %1066 = vmatpush2.msra.mxu0 0.0
        %1067 = vmatprep.subr.mxu0 0.0
        %1068 = vmatpush2.msra.mxu0 0.0
        %1069 = vmatprep.subr.mxu0 0.0
        %1070 = vmatpush2.msra.mxu0 0.0
        %1071 = vmatprep.mubr.f32.mxu0 0.0
        %v1072 = vand.u32 %v716, 4294901760
        %v1073 = vsub.f32 %v716, %v1072
        %1074 = vmatmul.mubr.f32.gmra.mxu0 %v1073
        %v1075 = vpop.f32.mrf.mxu0
        %v1076 = vadd.f32 %v972, %v1075
        %v1077 = vpop.f32.mrf.mxu0
        %1078 = vdwg.mxu0
        %1079 = vmatprep.subr.mxu0 0.0
        %v1080 = vand.u32 %v732, 4294901760
        %1081 = vmatpush1.msra.mxu0 %v1080
        %1082 = vmatprep.subr.mxu0 0.0
        %v1083 = vand.u32 %v731, 4294901760
        %1084 = vmatpush1.msra.mxu0 %v1083
        %1085 = vmatprep.subr.mxu0 0.0
        %v1086 = vand.u32 %v730, 4294901760
        %1087 = vmatpush1.msra.mxu0 %v1086
        %1088 = vmatprep.subr.mxu0 0.0
        %v1089 = vand.u32 %v729, 4294901760
        %1090 = vmatpush1.msra.mxu0 %v1089
        %1091 = vmatprep.subr.mxu0 0.0
        %v1092 = vand.u32 %v728, 4294901760
        %1093 = vmatpush1.msra.mxu0 %v1092
        %1094 = vmatprep.subr.mxu0 0.0
        %v1095 = vand.u32 %v727, 4294901760
        %1096 = vmatpush1.msra.mxu0 %v1095
        %1097 = vmatprep.subr.mxu0 0.0
        %v1098 = vand.u32 %v726, 4294901760
        %1099 = vmatpush1.msra.mxu0 %v1098
        %1100 = vmatprep.subr.mxu0 0.0
        %v1101 = vand.u32 %v725, 4294901760
        %1102 = vmatpush1.msra.mxu0 %v1101
        %1103 = vmatprep.subr.mxu0 0.0
        %v1104 = vand.u32 %v724, 4294901760
        %1105 = vmatpush1.msra.mxu0 %v1104
        %1106 = vmatprep.subr.mxu0 0.0
        %v1107 = vand.u32 %v723, 4294901760
        %1108 = vmatpush1.msra.mxu0 %v1107
        %1109 = vmatprep.subr.mxu0 0.0
        %v1110 = vand.u32 %v722, 4294901760
        %1111 = vmatpush1.msra.mxu0 %v1110
        %1112 = vmatprep.subr.mxu0 0.0
        %v1113 = vand.u32 %v721, 4294901760
        %1114 = vmatpush1.msra.mxu0 %v1113
        %1115 = vmatprep.subr.mxu0 0.0
        %v1116 = vand.u32 %v720, 4294901760
        %1117 = vmatpush1.msra.mxu0 %v1116
        %1118 = vmatprep.subr.mxu0 0.0
        %v1119 = vand.u32 %v719, 4294901760
        %1120 = vmatpush1.msra.mxu0 %v1119
        %1121 = vmatprep.subr.mxu0 0.0
        %v1122 = vand.u32 %v718, 4294901760
        %1123 = vmatpush1.msra.mxu0 %v1122
        %1124 = vmatprep.subr.mxu0 0.0
        %v1125 = vand.u32 %v717, 4294901760
        %1126 = vmatpush1.msra.mxu0 %v1125
        %1127 = vmatprep.subr.mxu0 0.0
        %1128 = vmatpush2.msra.mxu0 0.0
        %1129 = vmatprep.subr.mxu0 0.0
        %1130 = vmatpush2.msra.mxu0 0.0
        %1131 = vmatprep.subr.mxu0 0.0
        %1132 = vmatpush2.msra.mxu0 0.0
        %1133 = vmatprep.subr.mxu0 0.0
        %1134 = vmatpush2.msra.mxu0 0.0
        %1135 = vmatprep.subr.mxu0 0.0
        %1136 = vmatpush2.msra.mxu0 0.0
        %1137 = vmatprep.subr.mxu0 0.0
        %1138 = vmatpush2.msra.mxu0 0.0
        %1139 = vmatprep.subr.mxu0 0.0
        %1140 = vmatpush2.msra.mxu0 0.0
        %1141 = vmatprep.subr.mxu0 0.0
        %1142 = vmatpush2.msra.mxu0 0.0
        %1143 = vmatprep.subr.mxu0 0.0
        %1144 = vmatpush2.msra.mxu0 0.0
        %1145 = vmatprep.subr.mxu0 0.0
        %1146 = vmatpush2.msra.mxu0 0.0
        %1147 = vmatprep.subr.mxu0 0.0
        %1148 = vmatpush2.msra.mxu0 0.0
        %1149 = vmatprep.subr.mxu0 0.0
        %1150 = vmatpush2.msra.mxu0 0.0
        %1151 = vmatprep.subr.mxu0 0.0
        %1152 = vmatpush2.msra.mxu0 0.0
        %1153 = vmatprep.subr.mxu0 0.0
        %1154 = vmatpush2.msra.mxu0 0.0
        %1155 = vmatprep.subr.mxu0 0.0
        %1156 = vmatpush2.msra.mxu0 0.0
        %1157 = vmatprep.subr.mxu0 0.0
        %1158 = vmatpush2.msra.mxu0 0.0
        %1159 = vmatprep.mubr.f32.mxu0 0.0
        %v1160 = vand.u32 %v716, 4294901760
        %v1161 = vsub.f32 %v716, %v1160
        %v1162 = vand.u32 %v1161, 4294901760
        %1163 = vmatmul.mubr.f32.gmra.mxu0 %v1162
        %v1164 = vpop.f32.mrf.mxu0
        %v1165 = vadd.f32 %v1076, %v1164
        %v1166 = vpop.f32.mrf.mxu0
        %1167 = vdwg.mxu0
        %1168 = vmatprep.subr.mxu0 0.0
        %v1169 = vand.u32 %v732, 4294901760
        %v1170 = vsub.f32 %v732, %v1169
        %v1171 = vand.u32 %v1170, 4294901760
        %1172 = vmatpush1.msra.mxu0 %v1171
        %1173 = vmatprep.subr.mxu0 0.0
        %v1174 = vand.u32 %v731, 4294901760
        %v1175 = vsub.f32 %v731, %v1174
        %v1176 = vand.u32 %v1175, 4294901760
        %1177 = vmatpush1.msra.mxu0 %v1176
        %1178 = vmatprep.subr.mxu0 0.0
        %v1179 = vand.u32 %v730, 4294901760
        %v1180 = vsub.f32 %v730, %v1179
        %v1181 = vand.u32 %v1180, 4294901760
        %1182 = vmatpush1.msra.mxu0 %v1181
        %1183 = vmatprep.subr.mxu0 0.0
        %v1184 = vand.u32 %v729, 4294901760
        %v1185 = vsub.f32 %v729, %v1184
        %v1186 = vand.u32 %v1185, 4294901760
        %1187 = vmatpush1.msra.mxu0 %v1186
        %1188 = vmatprep.subr.mxu0 0.0
        %v1189 = vand.u32 %v728, 4294901760
        %v1190 = vsub.f32 %v728, %v1189
        %v1191 = vand.u32 %v1190, 4294901760
        %1192 = vmatpush1.msra.mxu0 %v1191
        %1193 = vmatprep.subr.mxu0 0.0
        %v1194 = vand.u32 %v727, 4294901760
        %v1195 = vsub.f32 %v727, %v1194
        %v1196 = vand.u32 %v1195, 4294901760
        %1197 = vmatpush1.msra.mxu0 %v1196
        %1198 = vmatprep.subr.mxu0 0.0
        %v1199 = vand.u32 %v726, 4294901760
        %v1200 = vsub.f32 %v726, %v1199
        %v1201 = vand.u32 %v1200, 4294901760
        %1202 = vmatpush1.msra.mxu0 %v1201
        %1203 = vmatprep.subr.mxu0 0.0
        %v1204 = vand.u32 %v725, 4294901760
        %v1205 = vsub.f32 %v725, %v1204
        %v1206 = vand.u32 %v1205, 4294901760
        %1207 = vmatpush1.msra.mxu0 %v1206
        %1208 = vmatprep.subr.mxu0 0.0
        %v1209 = vand.u32 %v724, 4294901760
        %v1210 = vsub.f32 %v724, %v1209
        %v1211 = vand.u32 %v1210, 4294901760
        %1212 = vmatpush1.msra.mxu0 %v1211
        %1213 = vmatprep.subr.mxu0 0.0
        %v1214 = vand.u32 %v723, 4294901760
        %v1215 = vsub.f32 %v723, %v1214
        %v1216 = vand.u32 %v1215, 4294901760
        %1217 = vmatpush1.msra.mxu0 %v1216
        %1218 = vmatprep.subr.mxu0 0.0
        %v1219 = vand.u32 %v722, 4294901760
        %v1220 = vsub.f32 %v722, %v1219
        %v1221 = vand.u32 %v1220, 4294901760
        %1222 = vmatpush1.msra.mxu0 %v1221
        %1223 = vmatprep.subr.mxu0 0.0
        %v1224 = vand.u32 %v721, 4294901760
        %v1225 = vsub.f32 %v721, %v1224
        %v1226 = vand.u32 %v1225, 4294901760
        %1227 = vmatpush1.msra.mxu0 %v1226
        %1228 = vmatprep.subr.mxu0 0.0
        %v1229 = vand.u32 %v720, 4294901760
        %v1230 = vsub.f32 %v720, %v1229
        %v1231 = vand.u32 %v1230, 4294901760
        %1232 = vmatpush1.msra.mxu0 %v1231
        %1233 = vmatprep.subr.mxu0 0.0
        %v1234 = vand.u32 %v719, 4294901760
        %v1235 = vsub.f32 %v719, %v1234
        %v1236 = vand.u32 %v1235, 4294901760
        %1237 = vmatpush1.msra.mxu0 %v1236
        %1238 = vmatprep.subr.mxu0 0.0
        %v1239 = vand.u32 %v718, 4294901760
        %v1240 = vsub.f32 %v718, %v1239
        %v1241 = vand.u32 %v1240, 4294901760
        %1242 = vmatpush1.msra.mxu0 %v1241
        %1243 = vmatprep.subr.mxu0 0.0
        %v1244 = vand.u32 %v717, 4294901760
        %v1245 = vsub.f32 %v717, %v1244
        %v1246 = vand.u32 %v1245, 4294901760
        %1247 = vmatpush1.msra.mxu0 %v1246
        %1248 = vmatprep.subr.mxu0 0.0
        %1249 = vmatpush2.msra.mxu0 0.0
        %1250 = vmatprep.subr.mxu0 0.0
        %1251 = vmatpush2.msra.mxu0 0.0
        %1252 = vmatprep.subr.mxu0 0.0
        %1253 = vmatpush2.msra.mxu0 0.0
        %1254 = vmatprep.subr.mxu0 0.0
        %1255 = vmatpush2.msra.mxu0 0.0
        %1256 = vmatprep.subr.mxu0 0.0
        %1257 = vmatpush2.msra.mxu0 0.0
        %1258 = vmatprep.subr.mxu0 0.0
        %1259 = vmatpush2.msra.mxu0 0.0
        %1260 = vmatprep.subr.mxu0 0.0
        %1261 = vmatpush2.msra.mxu0 0.0
        %1262 = vmatprep.subr.mxu0 0.0
        %1263 = vmatpush2.msra.mxu0 0.0
        %1264 = vmatprep.subr.mxu0 0.0
        %1265 = vmatpush2.msra.mxu0 0.0
        %1266 = vmatprep.subr.mxu0 0.0
        %1267 = vmatpush2.msra.mxu0 0.0
        %1268 = vmatprep.subr.mxu0 0.0
        %1269 = vmatpush2.msra.mxu0 0.0
        %1270 = vmatprep.subr.mxu0 0.0
        %1271 = vmatpush2.msra.mxu0 0.0
        %1272 = vmatprep.subr.mxu0 0.0
        %1273 = vmatpush2.msra.mxu0 0.0
        %1274 = vmatprep.subr.mxu0 0.0
        %1275 = vmatpush2.msra.mxu0 0.0
        %1276 = vmatprep.subr.mxu0 0.0
        %1277 = vmatpush2.msra.mxu0 0.0
        %1278 = vmatprep.subr.mxu0 0.0
        %1279 = vmatpush2.msra.mxu0 0.0
        %1280 = vmatprep.mubr.f32.mxu0 0.0
        %v1281 = vand.u32 %v716, 4294901760
        %1282 = vmatmul.mubr.f32.gmra.mxu0 %v1281
        %v1283 = vpop.f32.mrf.mxu0
        %v1284 = vadd.f32 %v1165, %v1283
        %v1285 = vpop.f32.mrf.mxu0
        %1286 = vdwg.mxu0
        %1287 = vmatprep.subr.mxu0 0.0
        %v1288 = vand.u32 %v732, 4294901760
        %1289 = vmatpush1.msra.mxu0 %v1288
        %1290 = vmatprep.subr.mxu0 0.0
        %v1291 = vand.u32 %v731, 4294901760
        %1292 = vmatpush1.msra.mxu0 %v1291
        %1293 = vmatprep.subr.mxu0 0.0
        %v1294 = vand.u32 %v730, 4294901760
        %1295 = vmatpush1.msra.mxu0 %v1294
        %1296 = vmatprep.subr.mxu0 0.0
        %v1297 = vand.u32 %v729, 4294901760
        %1298 = vmatpush1.msra.mxu0 %v1297
        %1299 = vmatprep.subr.mxu0 0.0
        %v1300 = vand.u32 %v728, 4294901760
        %1301 = vmatpush1.msra.mxu0 %v1300
        %1302 = vmatprep.subr.mxu0 0.0
        %v1303 = vand.u32 %v727, 4294901760
        %1304 = vmatpush1.msra.mxu0 %v1303
        %1305 = vmatprep.subr.mxu0 0.0
        %v1306 = vand.u32 %v726, 4294901760
        %1307 = vmatpush1.msra.mxu0 %v1306
        %1308 = vmatprep.subr.mxu0 0.0
        %v1309 = vand.u32 %v725, 4294901760
        %1310 = vmatpush1.msra.mxu0 %v1309
        %1311 = vmatprep.subr.mxu0 0.0
        %v1312 = vand.u32 %v724, 4294901760
        %1313 = vmatpush1.msra.mxu0 %v1312
        %1314 = vmatprep.subr.mxu0 0.0
        %v1315 = vand.u32 %v723, 4294901760
        %1316 = vmatpush1.msra.mxu0 %v1315
        %1317 = vmatprep.subr.mxu0 0.0
        %v1318 = vand.u32 %v722, 4294901760
        %1319 = vmatpush1.msra.mxu0 %v1318
        %1320 = vmatprep.subr.mxu0 0.0
        %v1321 = vand.u32 %v721, 4294901760
        %1322 = vmatpush1.msra.mxu0 %v1321
        %1323 = vmatprep.subr.mxu0 0.0
        %v1324 = vand.u32 %v720, 4294901760
        %1325 = vmatpush1.msra.mxu0 %v1324
        %1326 = vmatprep.subr.mxu0 0.0
        %v1327 = vand.u32 %v719, 4294901760
        %1328 = vmatpush1.msra.mxu0 %v1327
        %1329 = vmatprep.subr.mxu0 0.0
        %v1330 = vand.u32 %v718, 4294901760
        %1331 = vmatpush1.msra.mxu0 %v1330
        %1332 = vmatprep.subr.mxu0 0.0
        %v1333 = vand.u32 %v717, 4294901760
        %1334 = vmatpush1.msra.mxu0 %v1333
        %1335 = vmatprep.subr.mxu0 0.0
        %1336 = vmatpush2.msra.mxu0 0.0
        %1337 = vmatprep.subr.mxu0 0.0
        %1338 = vmatpush2.msra.mxu0 0.0
        %1339 = vmatprep.subr.mxu0 0.0
        %1340 = vmatpush2.msra.mxu0 0.0
        %1341 = vmatprep.subr.mxu0 0.0
        %1342 = vmatpush2.msra.mxu0 0.0
        %1343 = vmatprep.subr.mxu0 0.0
        %1344 = vmatpush2.msra.mxu0 0.0
        %1345 = vmatprep.subr.mxu0 0.0
        %1346 = vmatpush2.msra.mxu0 0.0
        %1347 = vmatprep.subr.mxu0 0.0
        %1348 = vmatpush2.msra.mxu0 0.0
        %1349 = vmatprep.subr.mxu0 0.0
        %1350 = vmatpush2.msra.mxu0 0.0
        %1351 = vmatprep.subr.mxu0 0.0
        %1352 = vmatpush2.msra.mxu0 0.0
        %1353 = vmatprep.subr.mxu0 0.0
        %1354 = vmatpush2.msra.mxu0 0.0
        %1355 = vmatprep.subr.mxu0 0.0
        %1356 = vmatpush2.msra.mxu0 0.0
        %1357 = vmatprep.subr.mxu0 0.0
        %1358 = vmatpush2.msra.mxu0 0.0
        %1359 = vmatprep.subr.mxu0 0.0
        %1360 = vmatpush2.msra.mxu0 0.0
        %1361 = vmatprep.subr.mxu0 0.0
        %1362 = vmatpush2.msra.mxu0 0.0
        %1363 = vmatprep.subr.mxu0 0.0
        %1364 = vmatpush2.msra.mxu0 0.0
        %1365 = vmatprep.subr.mxu0 0.0
        %1366 = vmatpush2.msra.mxu0 0.0
        %1367 = vmatprep.mubr.f32.mxu0 0.0
        %v1368 = vand.u32 %v716, 4294901760
        %1369 = vmatmul.mubr.f32.gmra.mxu0 %v1368
        %v1370 = vpop.f32.mrf.mxu0
        %v1371 = vadd.f32 %v1284, %v1370
        %v1372 = vpop.f32.mrf.mxu0
        %1373 = vdwg.mxu0
        %v1374 = vmul.f32 %v1371, 0.5
        %v1375 = vtanh.pop %v1374
        %v1376 = vadd.f32 %v1375, 1.0
        %v1377 = vmul.f32 %v1376, 0.5
        %v1378 = vmul.f32 %v166, %v1377
        %1379 = vst.msk [vmem:[%s161] sm:$0xff] %vm175, %v1378
        %s1380 = sand.u32 %s93, 1
        %s1381 = scalar_lea.sflag [#allocation3], %s1380
        %s1382 = sand.u32 %s93, 1
        %s1383 = smul.addr %s1382, 8
        %s1384 = scalar_lea.vmem [#allocation2], %s1383
        // Predicated region
        $region33: #{tpu_custom_call.1} parent=31 // pred_check
          %p1385 = pneg %p103
        $region34: #{tpu_custom_call.1} parent=31 // pred_check_branch
          %1387 = sbr.rel (%p1385) target = $region36
        $region35: #{tpu_custom_call.1} parent=31 // pred_region
          %s1389 = ssub.s32 128, 128
          %1390 = vsyncadd %s1381, %s1389
          %s1391 = smul.addr %s17, 128
          %s1392 = scalar_lea.hbm %s3, %s1391
          %s1394 = sshll.u32 %s1384, 4
          %s1395 = int_to_ptr.vmem [resolvable:$true] %s1394
          %1397 = dma.vmem_to_hbm [thread:$0]  %s1395, 128, %s1392, %s1381
        $region36: #{tpu_custom_call.1} parent=31 // pred_fallthru
          _
      $region32: #{tpu_custom_call.1} parent=5 // pred_fallthru
        _
      %p1398 = scmp.le.s32.totalorder 2, %s12
      // Predicated region
      $region37: #{tpu_custom_call.1} parent=5 // pred_check
        %p1399 = pneg %p1398
      $region38: #{tpu_custom_call.1} parent=5 // pred_check_branch
        %1401 = sbr.rel (%p1399) target = $region40
      $region39: #{tpu_custom_call.1} parent=5 // pred_region
        %s1402 = ssub.s32 %s12, 2
        // Predicated region
        $region41: #{tpu_custom_call.1} parent=39 // pred_check
          %p1403 = pneg %p109
        $region42: #{tpu_custom_call.1} parent=39 // pred_check_branch
          %1405 = sbr.rel (%p1403) target = $region44
        $region43: #{tpu_custom_call.1} parent=39 // pred_region
          %s1406 = sand.u32 %s94, 1
          %s1407 = scalar_lea.sflag [#allocation3], %s1406
          %s1408 = sand.u32 %s94, 1
          %s1409 = smul.addr %s1408, 8
          %s1410 = scalar_lea.vmem [#allocation2], %s1409
          %1411 = dma.done %s1407, 128
        $region44: #{tpu_custom_call.1} parent=39 // pred_fallthru
          _
      $region40: #{tpu_custom_call.1} parent=5 // pred_fallthru
        _
    $region6: #{tpu_custom_call.1} parent=1 // loop_footer
      %s16 = sadd.s32 1, %s12
    $region7: #{tpu_custom_call.1} parent=1 // loop_footer_branch
      %11 = sbr.rel target = $region3
    $region8: #{tpu_custom_call.1} parent=1 // loop_exit
      _
    %1412 = vsyncpa [#allocation3], 1
    %s1413 = scalar_lea.sflag [#allocation3], 1
    %1414 = vsyncpa %s1413, 1

</llo_original>
